<compile_context>
chip_gen: v7x
topology: tpu7x:2x2x1
jax: 0.10.0
libtpu: 0.0.40
codegen_flags: <defaults>
</compile_context>

<pallas_src>
import functools

import jax
import jax.numpy as jnp
from jax.experimental import pallas as pl
from jax.experimental.pallas import tpu as pltpu

M_HIDDEN = 50   # hidden width from the module (m = 50)
IN_DIM = 4      # 3 state dims + 1 time dim
STATE_DIM = 3
OUT_DIM = 3


# ----------------------------------------------------------------------------
# Kernel
# ----------------------------------------------------------------------------
def _odefunc_kernel(t_ref,                       # SMEM (1,) f32  (scalar prefetch)
                    x_ref,                       # (3, TN) f32, feature-major state
                    w1y_ref, b1b_ref, w1t_ref,   # (50, 3), (50, 1), (50, 1)  f32
                    w2_ref, b2_ref,              # (50, 50) mm_dtype, (50, 1) f32
                    w3_ref, b3_ref,              # (50, 50) mm_dtype, (50, 1) f32
                    w4_ref, b4_ref,              # (3, 50)  mm_dtype, (3, 1)  f32
                    o_ref):                      # (3, TN) f32
    mm_dtype = w2_ref.dtype

    x = x_ref[...]                                                   # (3, TN) f32
    w1 = w1y_ref[...]                                                # (50, 3) f32

    # Effective first-layer bias: t-independent fold + (t - 0.5) * W1[:, 3].
    b1 = b1b_ref[...] + (t_ref[0] - 0.5) * w1t_ref[...]              # (50, 1)

    # Layer 1 (K = 3): VPU broadcast-FMAs in f32 (skip the MXU for a 3-wide
    # contraction); fuse bias + ReLU + downcast.
    h = (w1[:, 0:1] * x[0:1, :]
         + w1[:, 1:2] * x[1:2, :]
         + w1[:, 2:3] * x[2:3, :]
         + b1)                                                        # (50, TN) f32
    h = jnp.maximum(h, 0.0).astype(mm_dtype)

    # Layers 2 & 3: MXU matmul (bf16 in, f32 accumulate), fused bias+ReLU+cast.
    h = jnp.maximum(
        jnp.dot(w2_ref[...], h, preferred_element_type=jnp.float32) + b2_ref[...],
        0.0).astype(mm_dtype)
    h = jnp.maximum(
        jnp.dot(w3_ref[...], h, preferred_element_type=jnp.float32) + b3_ref[...],
        0.0).astype(mm_dtype)

    # Output layer (no ReLU).
    o_ref[...] = (jnp.dot(w4_ref[...], h, preferred_element_type=jnp.float32)
                  + b4_ref[...]).astype(o_ref.dtype)


# ----------------------------------------------------------------------------
# Parameter preparation (t-independent; hoist out of the ODE hot loop)
# ----------------------------------------------------------------------------
def prepare_params(params, *, use_bf16=True):
    """Fold the -0.5 shift into the first-layer bias, split out the time
    column, and pre-cast the MXU weights.  All folds use f32 weights."""
    mm_dtype = jnp.bfloat16 if use_bf16 else jnp.float32

    w1 = params["w1"].astype(jnp.float32)                  # (50, 4)
    w1y = w1[:, :STATE_DIM]                                # (50, 3) f32 (VPU layer)
    w1_t = w1[:, STATE_DIM][:, None]                       # (50, 1) f32
    # (yt - 0.5) @ W1.T == y @ W1y.T + ((t-0.5)*W1[:,3] - 0.5*sum(W1y, 1)) + b1
    b1_base = (params["b1"].astype(jnp.float32)
               - 0.5 * jnp.sum(w1y, axis=1))[:, None]      # (50, 1) f32

    return dict(
        w1y=w1y, b1_base=b1_base, w1_t=w1_t,
        w2=params["w2"].astype(mm_dtype), b2=params["b2"][:, None].astype(jnp.float32),
        w3=params["w3"].astype(mm_dtype), b3=params["b3"][:, None].astype(jnp.float32),
        w4=params["w4"].astype(mm_dtype), b4=params["b4"][:, None].astype(jnp.float32),
    )


def _pick_tile(n, tile_n):
    """Lane-dense tile (multiple of 256 so the MXU N-dim tiles cleanly);
    capped so grid_n >= 2 whenever possible (v7x has 2 TensorCores)."""
    tile_n = max(256, 256 * (tile_n // 256))
    n_pad256 = 256 * pl.cdiv(n, 256)
    if n_pad256 >= 512:
        tile_n = min(tile_n, 256 * (n_pad256 // 512))
    return tile_n


# ----------------------------------------------------------------------------
# Feature-major hot-loop entry point: y_fm is (3, n_pad), n_pad % tile_n == 0.
# An ODE integrator should keep its state in this layout and call this
# directly (no transpose/pad/slice HBM round trips per f-eval).
# ----------------------------------------------------------------------------
def _odefunc_fm_call(t, y_fm, prep, *, tile_n, vmem_limit_bytes=None):
    n_pad = y_fm.shape[1]
    assert n_pad % tile_n == 0 and tile_n % 256 == 0
    grid_n = n_pad // tile_n

    t_arr = jnp.asarray(t, jnp.float32).reshape((1,))      # scalar prefetch (SMEM)

    # Weights/biases: constant-index full blocks -> VMEM resident across steps.
    full = lambda a: pl.BlockSpec(a.shape, lambda i, t_r: (0, 0))

    cp_kwargs = dict(dimension_semantics=("parallel",))
    if vmem_limit_bytes is not None:
        # Needed on v5e (16 MiB scoped default) only if tile_n is pushed past
        # ~8K-16K points; the default tiles stay far below every limit.
        cp_kwargs["vmem_limit_bytes"] = vmem_limit_bytes

    return pl.pallas_call(
        _odefunc_kernel,
        out_shape=jax.ShapeDtypeStruct((OUT_DIM, n_pad), y_fm.dtype),
        grid_spec=pltpu.PrefetchScalarGridSpec(
            num_scalar_prefetch=1,
            grid=(grid_n,),
            in_specs=[
                pl.BlockSpec((STATE_DIM, tile_n), lambda i, t_r: (0, i)),  # state
                full(prep["w1y"]), full(prep["b1_base"]), full(prep["w1_t"]),
                full(prep["w2"]), full(prep["b2"]),
                full(prep["w3"]), full(prep["b3"]),
                full(prep["w4"]), full(prep["b4"]),
            ],
            out_specs=pl.BlockSpec((OUT_DIM, tile_n), lambda i, t_r: (0, i)),
        ),
        compiler_params=pltpu.CompilerParams(**cp_kwargs),
    )(t_arr, y_fm,
      prep["w1y"], prep["b1_base"], prep["w1_t"],
      prep["w2"], prep["b2"], prep["w3"], prep["b3"], prep["w4"], prep["b4"])


# ----------------------------------------------------------------------------
# Torch-layout convenience wrapper (jitted so the layout plumbing fuses).
# ----------------------------------------------------------------------------
@functools.partial(jax.jit,
                   static_argnames=("tile_n", "use_bf16", "vmem_limit_bytes"))
def odefunc_forward(t, y, params, *, tile_n=2048, use_bf16=True,
                    vmem_limit_bytes=None):
    """Pallas equivalent of ODEFunc.forward(t, y).

    t: scalar time.  y: (N, 3) float32 state.
    params: torch-layout dict: w1 (50,4), w2/w3 (50,50), w4 (3,50); b* (out,).
    """
    n = y.shape[0]
    tile_n = _pick_tile(n, tile_n)
    n_pad = tile_n * pl.cdiv(n, tile_n)

    prep = prepare_params(params, use_bf16=use_bf16)

    # Feature-major, lane-dense: points along the 128-lane axis, zero-pad tail.
    y_fm = jnp.pad(jnp.transpose(y), ((0, 0), (0, n_pad - n)))       # (3, n_pad)

    out_fm = _odefunc_fm_call(t, y_fm, prep, tile_n=tile_n,
                              vmem_limit_bytes=vmem_limit_bytes)

    # Slice off the padded tail BEFORE transposing back to (N, 3).
    return jnp.transpose(out_fm[:, :n])


# ----------------------------------------------------------------------------
# Init + references
# ----------------------------------------------------------------------------
def init_params(key):
    """Deterministic init matching nn.init.normal_(std=0.1), bias=0.
    Weights stored torch-style (out_features, in_features)."""
    ks = jax.random.split(key, 4)
    dims = [(M_HIDDEN, IN_DIM), (M_HIDDEN, M_HIDDEN),
            (M_HIDDEN, M_HIDDEN), (OUT_DIM, M_HIDDEN)]
    params = {}
    for idx, (k, (dout, din)) in enumerate(zip(ks, dims), start=1):
        params[f"w{idx}"] = 0.1 * jax.random.normal(k, (dout, din), jnp.float32)
        params[f"b{idx}"] = jnp.zeros((dout,), jnp.float32)
    return params


def _torch_reference(t, y, params):
    """Exact torch-semantics reference in f32."""
    t_col = jnp.full((y.shape[0], 1), t, dtype=y.dtype)
    x = jnp.concatenate([y, t_col], axis=1) - 0.5
    h = jnp.maximum(x @ params["w1"].T + params["b1"], 0.0)
    h = jnp.maximum(h @ params["w2"].T + params["b2"], 0.0)
    h = jnp.maximum(h @ params["w3"].T + params["b3"], 0.0)
    return h @ params["w4"].T + params["b4"]


def _matched_reference(t, y, params, use_bf16=True):
    """Mirrors the kernel arithmetic (f32 first layer, bf16 MXU layers)."""
    mm_dtype = jnp.bfloat16 if use_bf16 else jnp.float32
    w1, b1 = params["w1"], params["b1"]
    w1y = w1[:, :STATE_DIM]
    b1_eff = b1 + (t - 0.5) * w1[:, STATE_DIM] - 0.5 * jnp.sum(w1y, axis=1)

    def mm(w, hh):
        return jnp.dot(w.astype(mm_dtype), hh, preferred_element_type=jnp.float32)

    x = jnp.transpose(y)                                             # (3, N)
    h = jnp.maximum(w1y @ x + b1_eff[:, None], 0.0).astype(mm_dtype)
    h = jnp.maximum(mm(params["w2"], h) + params["b2"][:, None], 0.0).astype(mm_dtype)
    h = jnp.maximum(mm(params["w3"], h) + params["b3"][:, None], 0.0).astype(mm_dtype)
    out = mm(params["w4"], h) + params["b4"][:, None]
    return jnp.transpose(out)


if __name__ == "__main__":
    key = jax.random.PRNGKey(0)
    kp, ky = jax.random.split(key)

    params = init_params(kp)
    N = 1000  # deliberately NOT a multiple of the tile -> exercises padded tail
    y = jax.random.normal(ky, (N, STATE_DIM), jnp.float32)
    t = jnp.float32(0.25)

    # Torch-layout convenience path (jitted wrapper).
    out = odefunc_forward(t, y, params)
    out = jax.block_until_ready(out)

    # Feature-major hot-loop path (what an odeint loop should call directly).
    prep = prepare_params(params, use_bf16=True)
    tile_n = _pick_tile(N, 2048)
    n_pad = tile_n * pl.cdiv(N, tile_n)
    y_fm = jnp.pad(jnp.transpose(y), ((0, 0), (0, n_pad - N)))
    out_fm = jax.block_until_ready(_odefunc_fm_call(t, y_fm, prep, tile_n=tile_n))
    out_fm_sliced = jnp.transpose(out_fm[:, :N])

    ref_matched = _matched_reference(t, y, params, use_bf16=True)
    ref_f32 = _torch_reference(t, y, params)

    assert out.shape == (N, OUT_DIM)
    # Both entry points run the same kernel arithmetic.
    assert jnp.allclose(out, out_fm_sliced, atol=1e-5, rtol=1e-5)
    # Tight check against an identically-rounded (bf16 MXU) reference.
    assert jnp.allclose(out, ref_matched, atol=2e-3, rtol=2e-2)
    # Loose sanity check against the exact f32 torch-semantics reference.
    assert jnp.allclose(out, ref_f32, atol=1e-2, rtol=1e-1)

    print("KERNEL_OK")
</pallas_src>

<mosaic_0001>
module attributes {stable_mosaic.version = 11 : i64} {
  func.func @_odefunc_kernel(%arg0: i32, %arg1: memref<1xf32, #tpu.memory_space<smem>>, %arg2: memref<3x512xf32, #tpu.memory_space<vmem>>, %arg3: memref<50x3xf32, #tpu.memory_space<vmem>>, %arg4: memref<50x1xf32, #tpu.memory_space<vmem>>, %arg5: memref<50x1xf32, #tpu.memory_space<vmem>>, %arg6: memref<50x50xbf16, #tpu.memory_space<vmem>>, %arg7: memref<50x1xf32, #tpu.memory_space<vmem>>, %arg8: memref<50x50xbf16, #tpu.memory_space<vmem>>, %arg9: memref<50x1xf32, #tpu.memory_space<vmem>>, %arg10: memref<3x50xbf16, #tpu.memory_space<vmem>>, %arg11: memref<3x1xf32, #tpu.memory_space<vmem>>, %arg12: memref<3x512xf32, #tpu.memory_space<vmem>>) attributes {dimension_semantics = [#tpu.dimension_semantics<parallel>], iteration_bounds = array<i64: 2>, scalar_prefetch = 1 : i64, scratch_operands = 0 : i64, tpu.core_type = #tpu.core_type<tc>, window_params = [{transform_indices = @transform_0, window_bounds = array<i64: 3, 512>}, {pipeline_mode = #tpu.pipeline_mode<synchronous>, transform_indices = @transform_1, window_bounds = array<i64: 50, 3>}, {pipeline_mode = #tpu.pipeline_mode<synchronous>, transform_indices = @transform_2, window_bounds = array<i64: 50, 1>}, {pipeline_mode = #tpu.pipeline_mode<synchronous>, transform_indices = @transform_3, window_bounds = array<i64: 50, 1>}, {pipeline_mode = #tpu.pipeline_mode<synchronous>, transform_indices = @transform_4, window_bounds = array<i64: 50, 50>}, {pipeline_mode = #tpu.pipeline_mode<synchronous>, transform_indices = @transform_5, window_bounds = array<i64: 50, 1>}, {pipeline_mode = #tpu.pipeline_mode<synchronous>, transform_indices = @transform_6, window_bounds = array<i64: 50, 50>}, {pipeline_mode = #tpu.pipeline_mode<synchronous>, transform_indices = @transform_7, window_bounds = array<i64: 50, 1>}, {pipeline_mode = #tpu.pipeline_mode<synchronous>, transform_indices = @transform_8, window_bounds = array<i64: 3, 50>}, {pipeline_mode = #tpu.pipeline_mode<synchronous>, transform_indices = @transform_9, window_bounds = array<i64: 3, 1>}, {transform_indices = @transform_10, window_bounds = array<i64: 3, 512>}]} {
    %c0 = arith.constant 0 : index
    %c0_0 = arith.constant 0 : index
    %0 = vector.load %arg2[%c0, %c0_0] : memref<3x512xf32, #tpu.memory_space<vmem>>, vector<3x512xf32>
    %c0_1 = arith.constant 0 : index
    %c0_2 = arith.constant 0 : index
    %1 = vector.load %arg3[%c0_1, %c0_2] : memref<50x3xf32, #tpu.memory_space<vmem>>, vector<50x3xf32>
    %c0_3 = arith.constant 0 : index
    %c0_4 = arith.constant 0 : index
    %2 = vector.load %arg4[%c0_3, %c0_4] : memref<50x1xf32, #tpu.memory_space<vmem>>, vector<50x1xf32>
    %c0_5 = arith.constant 0 : index
    %3 = memref.load %arg1[%c0_5] : memref<1xf32, #tpu.memory_space<smem>>
    %cst = arith.constant 5.000000e-01 : f32
    %4 = arith.subf %3, %cst : f32
    %c0_6 = arith.constant 0 : index
    %c0_7 = arith.constant 0 : index
    %5 = vector.load %arg5[%c0_6, %c0_7] : memref<50x1xf32, #tpu.memory_space<vmem>>, vector<50x1xf32>
    %6 = vector.broadcast %4 : f32 to vector<50x1xf32>
    %7 = arith.mulf %6, %5 : vector<50x1xf32>
    %8 = arith.addf %2, %7 : vector<50x1xf32>
    %9 = vector.extract_strided_slice %1 {offsets = [0, 0], sizes = [50, 1], strides = [1, 1]} : vector<50x3xf32> to vector<50x1xf32>
    %10 = vector.extract_strided_slice %0 {offsets = [0, 0], sizes = [1, 512], strides = [1, 1]} : vector<3x512xf32> to vector<1x512xf32>
    %11 = vector.broadcast %9 : vector<50x1xf32> to vector<50x512xf32>
    %12 = vector.broadcast %10 : vector<1x512xf32> to vector<50x512xf32>
    %13 = arith.mulf %11, %12 : vector<50x512xf32>
    %14 = vector.extract_strided_slice %1 {offsets = [0, 1], sizes = [50, 1], strides = [1, 1]} : vector<50x3xf32> to vector<50x1xf32>
    %15 = vector.extract_strided_slice %0 {offsets = [1, 0], sizes = [1, 512], strides = [1, 1]} : vector<3x512xf32> to vector<1x512xf32>
    %16 = vector.broadcast %14 : vector<50x1xf32> to vector<50x512xf32>
    %17 = vector.broadcast %15 : vector<1x512xf32> to vector<50x512xf32>
    %18 = arith.mulf %16, %17 : vector<50x512xf32>
    %19 = arith.addf %13, %18 : vector<50x512xf32>
    %20 = vector.extract_strided_slice %1 {offsets = [0, 2], sizes = [50, 1], strides = [1, 1]} : vector<50x3xf32> to vector<50x1xf32>
    %21 = vector.extract_strided_slice %0 {offsets = [2, 0], sizes = [1, 512], strides = [1, 1]} : vector<3x512xf32> to vector<1x512xf32>
    %22 = vector.broadcast %20 : vector<50x1xf32> to vector<50x512xf32>
    %23 = vector.broadcast %21 : vector<1x512xf32> to vector<50x512xf32>
    %24 = arith.mulf %22, %23 : vector<50x512xf32>
    %25 = arith.addf %19, %24 : vector<50x512xf32>
    %26 = vector.broadcast %8 : vector<50x1xf32> to vector<50x512xf32>
    %27 = arith.addf %25, %26 : vector<50x512xf32>
    %cst_8 = arith.constant 0.000000e+00 : f32
    %28 = vector.broadcast %cst_8 : f32 to vector<50x512xf32>
    %29 = arith.maximumf %27, %28 : vector<50x512xf32>
    %30 = arith.truncf %29 : vector<50x512xf32> to vector<50x512xbf16>
    %c0_9 = arith.constant 0 : index
    %c0_10 = arith.constant 0 : index
    %31 = vector.load %arg6[%c0_9, %c0_10] : memref<50x50xbf16, #tpu.memory_space<vmem>>, vector<50x50xbf16>
    %cst_11 = arith.constant dense<0.000000e+00> : vector<50x512xf32>
    %32 = tpu.matmul %31, %30, %cst_11 {dimension_numbers = #tpu.dot_dimension_numbers<[1], [0], [0], [1], [0, 0, 1, 1], [], []>} : vector<50x50xbf16>, vector<50x512xbf16>, vector<50x512xf32> -> vector<50x512xf32>
    %c0_12 = arith.constant 0 : index
    %c0_13 = arith.constant 0 : index
    %33 = vector.load %arg7[%c0_12, %c0_13] : memref<50x1xf32, #tpu.memory_space<vmem>>, vector<50x1xf32>
    %34 = vector.broadcast %33 : vector<50x1xf32> to vector<50x512xf32>
    %35 = arith.addf %32, %34 : vector<50x512xf32>
    %cst_14 = arith.constant 0.000000e+00 : f32
    %36 = vector.broadcast %cst_14 : f32 to vector<50x512xf32>
    %37 = arith.maximumf %35, %36 : vector<50x512xf32>
    %38 = arith.truncf %37 : vector<50x512xf32> to vector<50x512xbf16>
    %c0_15 = arith.constant 0 : index
    %c0_16 = arith.constant 0 : index
    %39 = vector.load %arg8[%c0_15, %c0_16] : memref<50x50xbf16, #tpu.memory_space<vmem>>, vector<50x50xbf16>
    %cst_17 = arith.constant dense<0.000000e+00> : vector<50x512xf32>
    %40 = tpu.matmul %39, %38, %cst_17 {dimension_numbers = #tpu.dot_dimension_numbers<[1], [0], [0], [1], [0, 0, 1, 1], [], []>} : vector<50x50xbf16>, vector<50x512xbf16>, vector<50x512xf32> -> vector<50x512xf32>
    %c0_18 = arith.constant 0 : index
    %c0_19 = arith.constant 0 : index
    %41 = vector.load %arg9[%c0_18, %c0_19] : memref<50x1xf32, #tpu.memory_space<vmem>>, vector<50x1xf32>
    %42 = vector.broadcast %41 : vector<50x1xf32> to vector<50x512xf32>
    %43 = arith.addf %40, %42 : vector<50x512xf32>
    %cst_20 = arith.constant 0.000000e+00 : f32
    %44 = vector.broadcast %cst_20 : f32 to vector<50x512xf32>
    %45 = arith.maximumf %43, %44 : vector<50x512xf32>
    %46 = arith.truncf %45 : vector<50x512xf32> to vector<50x512xbf16>
    %c0_21 = arith.constant 0 : index
    %c0_22 = arith.constant 0 : index
    %47 = vector.load %arg10[%c0_21, %c0_22] : memref<3x50xbf16, #tpu.memory_space<vmem>>, vector<3x50xbf16>
    %cst_23 = arith.constant dense<0.000000e+00> : vector<3x512xf32>
    %48 = tpu.matmul %47, %46, %cst_23 {dimension_numbers = #tpu.dot_dimension_numbers<[1], [0], [0], [1], [0, 0, 1, 1], [], []>} : vector<3x50xbf16>, vector<50x512xbf16>, vector<3x512xf32> -> vector<3x512xf32>
    %c0_24 = arith.constant 0 : index
    %c0_25 = arith.constant 0 : index
    %49 = vector.load %arg11[%c0_24, %c0_25] : memref<3x1xf32, #tpu.memory_space<vmem>>, vector<3x1xf32>
    %50 = vector.broadcast %49 : vector<3x1xf32> to vector<3x512xf32>
    %51 = arith.addf %48, %50 : vector<3x512xf32>
    %c0_26 = arith.constant 0 : index
    %c0_27 = arith.constant 0 : index
    %52 = vector.load %arg12[%c0_26, %c0_27] : memref<3x512xf32, #tpu.memory_space<vmem>>, vector<3x512xf32>
    tpu.vector_store %arg12[%c0_26, %c0_27], %51 {strides = array<i32>} : memref<3x512xf32, #tpu.memory_space<vmem>>, vector<3x512xf32>,
    return
  }
  func.func @transform_0(%arg0: i32, %arg1: memref<1xf32, #tpu.memory_space<smem>>) -> (i32, i32) {
    %c0_i32 = arith.constant 0 : i32
    %c0_i32_0 = arith.constant 0 : i32
    return %c0_i32, %arg0 : i32, i32
  }
  func.func @transform_1(%arg0: i32, %arg1: memref<1xf32, #tpu.memory_space<smem>>) -> (i32, i32) {
    %c0_i32 = arith.constant 0 : i32
    %c0_i32_0 = arith.constant 0 : i32
    %c0_i32_1 = arith.constant 0 : i32
    return %c0_i32, %c0_i32_0 : i32, i32
  }
  func.func @transform_2(%arg0: i32, %arg1: memref<1xf32, #tpu.memory_space<smem>>) -> (i32, i32) {
    %c0_i32 = arith.constant 0 : i32
    %c0_i32_0 = arith.constant 0 : i32
    %c0_i32_1 = arith.constant 0 : i32
    return %c0_i32, %c0_i32_0 : i32, i32
  }
  func.func @transform_3(%arg0: i32, %arg1: memref<1xf32, #tpu.memory_space<smem>>) -> (i32, i32) {
    %c0_i32 = arith.constant 0 : i32
    %c0_i32_0 = arith.constant 0 : i32
    %c0_i32_1 = arith.constant 0 : i32
    return %c0_i32, %c0_i32_0 : i32, i32
  }
  func.func @transform_4(%arg0: i32, %arg1: memref<1xf32, #tpu.memory_space<smem>>) -> (i32, i32) {
    %c0_i32 = arith.constant 0 : i32
    %c0_i32_0 = arith.constant 0 : i32
    %c0_i32_1 = arith.constant 0 : i32
    return %c0_i32, %c0_i32_0 : i32, i32
  }
  func.func @transform_5(%arg0: i32, %arg1: memref<1xf32, #tpu.memory_space<smem>>) -> (i32, i32) {
    %c0_i32 = arith.constant 0 : i32
    %c0_i32_0 = arith.constant 0 : i32
    %c0_i32_1 = arith.constant 0 : i32
    return %c0_i32, %c0_i32_0 : i32, i32
  }
  func.func @transform_6(%arg0: i32, %arg1: memref<1xf32, #tpu.memory_space<smem>>) -> (i32, i32) {
    %c0_i32 = arith.constant 0 : i32
    %c0_i32_0 = arith.constant 0 : i32
    %c0_i32_1 = arith.constant 0 : i32
    return %c0_i32, %c0_i32_0 : i32, i32
  }
  func.func @transform_7(%arg0: i32, %arg1: memref<1xf32, #tpu.memory_space<smem>>) -> (i32, i32) {
    %c0_i32 = arith.constant 0 : i32
    %c0_i32_0 = arith.constant 0 : i32
    %c0_i32_1 = arith.constant 0 : i32
    return %c0_i32, %c0_i32_0 : i32, i32
  }
  func.func @transform_8(%arg0: i32, %arg1: memref<1xf32, #tpu.memory_space<smem>>) -> (i32, i32) {
    %c0_i32 = arith.constant 0 : i32
    %c0_i32_0 = arith.constant 0 : i32
    %c0_i32_1 = arith.constant 0 : i32
    return %c0_i32, %c0_i32_0 : i32, i32
  }
  func.func @transform_9(%arg0: i32, %arg1: memref<1xf32, #tpu.memory_space<smem>>) -> (i32, i32) {
    %c0_i32 = arith.constant 0 : i32
    %c0_i32_0 = arith.constant 0 : i32
    %c0_i32_1 = arith.constant 0 : i32
    return %c0_i32, %c0_i32_0 : i32, i32
  }
  func.func @transform_10(%arg0: i32, %arg1: memref<1xf32, #tpu.memory_space<smem>>) -> (i32, i32) {
    %c0_i32 = arith.constant 0 : i32
    %c0_i32_0 = arith.constant 0 : i32
    return %c0_i32, %arg0 : i32, i32
  }
}

</mosaic_0001>

<llo_original>
// kernel: odefunc_forward.1
$region0: #{odefunc_forward.1}
  #allocation0 [shape = 'u32[]', space=smem, size = 0x4, offset = 0x4, fixed_abs, tag = 'smem constant byte address 0x4 - core index']
  #allocation1 [shape = 'u32[144,128]{1,0:T(1,128)}', space=vmem, size = 0x12000, scoped, tag = 'internal scratch']
  #allocation2 [shape = 's32[1]{0}', space=sflag, size = 0x4, scoped, tag = 'scoped memory for odefunc_forward.1']
  #allocation3 [shape = 'f32[1]{0:T(128)S(6)}', space=smem, size = 0x200, scoped, tag = 'prefetched SMEM operand 0']
  %s0 = inlined_call_operand.<no memory space> [shape: f32[1], index: 0, kind: input, shape index: {}]
  %s1 = inlined_call_operand.vmem [shape: f32[3,1024], index: 1, kind: input, shape index: {}]
  %s2 = inlined_call_operand.vmem [shape: f32[50,3], index: 2, kind: input, shape index: {}]
  %s3 = inlined_call_operand.vmem [shape: f32[50,1], index: 3, kind: input, shape index: {}]
  %s4 = inlined_call_operand.vmem [shape: f32[50,1], index: 4, kind: input, shape index: {}]
  %s5 = inlined_call_operand.vmem [shape: bf16[50,50], index: 5, kind: input, shape index: {}]
  %s6 = inlined_call_operand.vmem [shape: f32[50,1], index: 6, kind: input, shape index: {}]
  %s7 = inlined_call_operand.vmem [shape: bf16[50,50], index: 7, kind: input, shape index: {}]
  %s8 = inlined_call_operand.vmem [shape: f32[50,1], index: 8, kind: input, shape index: {}]
  %s9 = inlined_call_operand.vmem [shape: bf16[3,50], index: 9, kind: input, shape index: {}]
  %s10 = inlined_call_operand.vmem [shape: f32[3,1], index: 10, kind: input, shape index: {}]
  %s11 = inlined_call_operand.vmem [shape: f32[3,1024], index: 11, kind: output, shape index: {}]
  %s12 = sld [smem:[#allocation0]]
  $region73: #{odefunc_forward.1} parent=0
    _
  %s14 = ssub.s32 1, %s12
  %s15 = scalar_select 0, %s14, %s12
  %16 = sst [smem:[#allocation3]] %s0
  loop: start=0, step=1, limit=4
  $region2: #{odefunc_forward.1} parent=0 // loop_pre_header
    _
  $region3: #{odefunc_forward.1} parent=0 // loop_header
    %s18 = sphi 0, %s22
    %p19 = scmp.ge.s32.totalorder %s18, 4
    %s28 = sphi 0, %s30
    %s31 = sphi 0, %s28
    %s32 = sphi 0, %s31
    %s48 = sphi 0, %s32
    %s52 = sphi 0, %s52
    %s54 = sphi 0, %s52
    %s55 = sphi 0, %s54
    %s69 = sphi 0, %s55
    %s73 = sphi 0, %s73
    %s75 = sphi 0, %s73
    %s76 = sphi 0, %s75
    %s90 = sphi 0, %s76
    %s94 = sphi 0, %s94
    %s96 = sphi 0, %s94
    %s97 = sphi 0, %s96
    %s111 = sphi 0, %s97
    %s115 = sphi 0, %s115
    %s117 = sphi 0, %s115
    %s118 = sphi 0, %s117
    %s132 = sphi 0, %s118
    %s136 = sphi 0, %s136
    %s138 = sphi 0, %s136
    %s139 = sphi 0, %s138
    %s153 = sphi 0, %s139
    %s157 = sphi 0, %s157
    %s159 = sphi 0, %s157
    %s160 = sphi 0, %s159
    %s174 = sphi 0, %s160
    %s178 = sphi 0, %s178
    %s180 = sphi 0, %s178
    %s181 = sphi 0, %s180
    %s195 = sphi 0, %s181
    %s199 = sphi 0, %s199
    %s201 = sphi 0, %s199
    %s202 = sphi 0, %s201
    %s216 = sphi 0, %s202
    %s220 = sphi 0, %s220
    %s222 = sphi 0, %s220
    %s223 = sphi 0, %s222
    %s237 = sphi 0, %s223
    %s243 = sphi 0, %s245
    %s246 = sphi 0, %s243
    %s247 = sphi 0, %s246
    %s263 = sphi 0, %s247
  $region4: #{odefunc_forward.1} parent=0 // loop_header_branch
    %21 = sbr.rel (%p19) target = $region8
  $region5: #{odefunc_forward.1} parent=0 // loop_body
    %s23 = ssub.s32 %s18, 1
    %s24 = ssub.s32 %s18, 2
    %s25 = sadd.s32 %s18, 1
    %s26 = ssub.s32 %s18, %s25
    %p27 = scmp.eq.s32.totalorder %s26, 0
    %s29 = sadd.s32 %s28, 1
    %s30 = scalar_select %p27, %s28, %s29
    %p33 = pneg %p27
    %p34 = scmp.eq.s32.totalorder %s18, 1
    %p35 = por %p33, %p34
    %p36 = scmp.ne.s32.totalorder %s28, %s31
    %p37 = scmp.eq.s32.totalorder %s18, 0
    %p38 = por %p36, %p37
    %p39 = scmp.ne.s32.totalorder %s28, %s31
    %p40 = scmp.eq.s32.totalorder %s23, 1
    %p41 = por %p39, %p40
    %p42 = scmp.ne.s32.totalorder %s31, %s32
    %p43 = scmp.eq.s32.totalorder %s23, 0
    %p44 = por %p42, %p43
    %p45 = scmp.ne.s32.totalorder %s31, %s32
    %p46 = scmp.eq.s32.totalorder %s24, 1
    %p47 = por %p45, %p46
    %p49 = scmp.ne.s32.totalorder %s32, %s48
    %p50 = scmp.eq.s32.totalorder %s24, 0
    %p51 = por %p49, %p50
    %s53 = sadd.s32 %s52, 1
    %p56 = scmp.eq.s32.totalorder %s18, 1
    %p57 = scmp.ne.s32.totalorder %s52, %s54
    %p58 = scmp.eq.s32.totalorder %s18, 0
    %p59 = por %p57, %p58
    %p60 = scmp.ne.s32.totalorder %s52, %s54
    %p61 = scmp.eq.s32.totalorder %s23, 1
    %p62 = por %p60, %p61
    %p63 = scmp.ne.s32.totalorder %s54, %s55
    %p64 = scmp.eq.s32.totalorder %s23, 0
    %p65 = por %p63, %p64
    %p66 = scmp.ne.s32.totalorder %s54, %s55
    %p67 = scmp.eq.s32.totalorder %s24, 1
    %p68 = por %p66, %p67
    %p70 = scmp.ne.s32.totalorder %s55, %s69
    %p71 = scmp.eq.s32.totalorder %s24, 0
    %p72 = por %p70, %p71
    %s74 = sadd.s32 %s73, 1
    %p77 = scmp.eq.s32.totalorder %s18, 1
    %p78 = scmp.ne.s32.totalorder %s73, %s75
    %p79 = scmp.eq.s32.totalorder %s18, 0
    %p80 = por %p78, %p79
    %p81 = scmp.ne.s32.totalorder %s73, %s75
    %p82 = scmp.eq.s32.totalorder %s23, 1
    %p83 = por %p81, %p82
    %p84 = scmp.ne.s32.totalorder %s75, %s76
    %p85 = scmp.eq.s32.totalorder %s23, 0
    %p86 = por %p84, %p85
    %p87 = scmp.ne.s32.totalorder %s75, %s76
    %p88 = scmp.eq.s32.totalorder %s24, 1
    %p89 = por %p87, %p88
    %p91 = scmp.ne.s32.totalorder %s76, %s90
    %p92 = scmp.eq.s32.totalorder %s24, 0
    %p93 = por %p91, %p92
    %s95 = sadd.s32 %s94, 1
    %p98 = scmp.eq.s32.totalorder %s18, 1
    %p99 = scmp.ne.s32.totalorder %s94, %s96
    %p100 = scmp.eq.s32.totalorder %s18, 0
    %p101 = por %p99, %p100
    %p102 = scmp.ne.s32.totalorder %s94, %s96
    %p103 = scmp.eq.s32.totalorder %s23, 1
    %p104 = por %p102, %p103
    %p105 = scmp.ne.s32.totalorder %s96, %s97
    %p106 = scmp.eq.s32.totalorder %s23, 0
    %p107 = por %p105, %p106
    %p108 = scmp.ne.s32.totalorder %s96, %s97
    %p109 = scmp.eq.s32.totalorder %s24, 1
    %p110 = por %p108, %p109
    %p112 = scmp.ne.s32.totalorder %s97, %s111
    %p113 = scmp.eq.s32.totalorder %s24, 0
    %p114 = por %p112, %p113
    %s116 = sadd.s32 %s115, 1
    %p119 = scmp.eq.s32.totalorder %s18, 1
    %p120 = scmp.ne.s32.totalorder %s115, %s117
    %p121 = scmp.eq.s32.totalorder %s18, 0
    %p122 = por %p120, %p121
    %p123 = scmp.ne.s32.totalorder %s115, %s117
    %p124 = scmp.eq.s32.totalorder %s23, 1
    %p125 = por %p123, %p124
    %p126 = scmp.ne.s32.totalorder %s117, %s118
    %p127 = scmp.eq.s32.totalorder %s23, 0
    %p128 = por %p126, %p127
    %p129 = scmp.ne.s32.totalorder %s117, %s118
    %p130 = scmp.eq.s32.totalorder %s24, 1
    %p131 = por %p129, %p130
    %p133 = scmp.ne.s32.totalorder %s118, %s132
    %p134 = scmp.eq.s32.totalorder %s24, 0
    %p135 = por %p133, %p134
    %s137 = sadd.s32 %s136, 1
    %p140 = scmp.eq.s32.totalorder %s18, 1
    %p141 = scmp.ne.s32.totalorder %s136, %s138
    %p142 = scmp.eq.s32.totalorder %s18, 0
    %p143 = por %p141, %p142
    %p144 = scmp.ne.s32.totalorder %s136, %s138
    %p145 = scmp.eq.s32.totalorder %s23, 1
    %p146 = por %p144, %p145
    %p147 = scmp.ne.s32.totalorder %s138, %s139
    %p148 = scmp.eq.s32.totalorder %s23, 0
    %p149 = por %p147, %p148
    %p150 = scmp.ne.s32.totalorder %s138, %s139
    %p151 = scmp.eq.s32.totalorder %s24, 1
    %p152 = por %p150, %p151
    %p154 = scmp.ne.s32.totalorder %s139, %s153
    %p155 = scmp.eq.s32.totalorder %s24, 0
    %p156 = por %p154, %p155
    %s158 = sadd.s32 %s157, 1
    %p161 = scmp.eq.s32.totalorder %s18, 1
    %p162 = scmp.ne.s32.totalorder %s157, %s159
    %p163 = scmp.eq.s32.totalorder %s18, 0
    %p164 = por %p162, %p163
    %p165 = scmp.ne.s32.totalorder %s157, %s159
    %p166 = scmp.eq.s32.totalorder %s23, 1
    %p167 = por %p165, %p166
    %p168 = scmp.ne.s32.totalorder %s159, %s160
    %p169 = scmp.eq.s32.totalorder %s23, 0
    %p170 = por %p168, %p169
    %p171 = scmp.ne.s32.totalorder %s159, %s160
    %p172 = scmp.eq.s32.totalorder %s24, 1
    %p173 = por %p171, %p172
    %p175 = scmp.ne.s32.totalorder %s160, %s174
    %p176 = scmp.eq.s32.totalorder %s24, 0
    %p177 = por %p175, %p176
    %s179 = sadd.s32 %s178, 1
    %p182 = scmp.eq.s32.totalorder %s18, 1
    %p183 = scmp.ne.s32.totalorder %s178, %s180
    %p184 = scmp.eq.s32.totalorder %s18, 0
    %p185 = por %p183, %p184
    %p186 = scmp.ne.s32.totalorder %s178, %s180
    %p187 = scmp.eq.s32.totalorder %s23, 1
    %p188 = por %p186, %p187
    %p189 = scmp.ne.s32.totalorder %s180, %s181
    %p190 = scmp.eq.s32.totalorder %s23, 0
    %p191 = por %p189, %p190
    %p192 = scmp.ne.s32.totalorder %s180, %s181
    %p193 = scmp.eq.s32.totalorder %s24, 1
    %p194 = por %p192, %p193
    %p196 = scmp.ne.s32.totalorder %s181, %s195
    %p197 = scmp.eq.s32.totalorder %s24, 0
    %p198 = por %p196, %p197
    %s200 = sadd.s32 %s199, 1
    %p203 = scmp.eq.s32.totalorder %s18, 1
    %p204 = scmp.ne.s32.totalorder %s199, %s201
    %p205 = scmp.eq.s32.totalorder %s18, 0
    %p206 = por %p204, %p205
    %p207 = scmp.ne.s32.totalorder %s199, %s201
    %p208 = scmp.eq.s32.totalorder %s23, 1
    %p209 = por %p207, %p208
    %p210 = scmp.ne.s32.totalorder %s201, %s202
    %p211 = scmp.eq.s32.totalorder %s23, 0
    %p212 = por %p210, %p211
    %p213 = scmp.ne.s32.totalorder %s201, %s202
    %p214 = scmp.eq.s32.totalorder %s24, 1
    %p215 = por %p213, %p214
    %p217 = scmp.ne.s32.totalorder %s202, %s216
    %p218 = scmp.eq.s32.totalorder %s24, 0
    %p219 = por %p217, %p218
    %s221 = sadd.s32 %s220, 1
    %p224 = scmp.eq.s32.totalorder %s18, 1
    %p225 = scmp.ne.s32.totalorder %s220, %s222
    %p226 = scmp.eq.s32.totalorder %s18, 0
    %p227 = por %p225, %p226
    %p228 = scmp.ne.s32.totalorder %s220, %s222
    %p229 = scmp.eq.s32.totalorder %s23, 1
    %p230 = por %p228, %p229
    %p231 = scmp.ne.s32.totalorder %s222, %s223
    %p232 = scmp.eq.s32.totalorder %s23, 0
    %p233 = por %p231, %p232
    %p234 = scmp.ne.s32.totalorder %s222, %s223
    %p235 = scmp.eq.s32.totalorder %s24, 1
    %p236 = por %p234, %p235
    %p238 = scmp.ne.s32.totalorder %s223, %s237
    %p239 = scmp.eq.s32.totalorder %s24, 0
    %p240 = por %p238, %p239
    %s241 = ssub.s32 %s18, %s25
    %p242 = scmp.eq.s32.totalorder %s241, 0
    %s244 = sadd.s32 %s243, 1
    %s245 = scalar_select %p242, %s243, %s244
    %p248 = pneg %p242
    %p249 = scmp.eq.s32.totalorder %s18, 1
    %p250 = por %p248, %p249
    %p251 = scmp.ne.s32.totalorder %s243, %s246
    %p252 = scmp.eq.s32.totalorder %s18, 0
    %p253 = por %p251, %p252
    %p254 = scmp.ne.s32.totalorder %s243, %s246
    %p255 = scmp.eq.s32.totalorder %s23, 1
    %p256 = por %p254, %p255
    %p257 = scmp.ne.s32.totalorder %s246, %s247
    %p258 = scmp.eq.s32.totalorder %s23, 0
    %p259 = por %p257, %p258
    %p260 = scmp.ne.s32.totalorder %s246, %s247
    %p261 = scmp.eq.s32.totalorder %s24, 1
    %p262 = por %p260, %p261
    %p264 = scmp.ne.s32.totalorder %s247, %s263
    %p265 = scmp.eq.s32.totalorder %s24, 0
    %p266 = por %p264, %p265
    %p267 = scmp.le.s32.totalorder 1, %s18
    %p268 = scmp.lt.s32.totalorder %s18, 3
    %p269 = pnand %p267, %p268
    %p270 = pneg %p269
    // Predicated region
    $region9: #{odefunc_forward.1} parent=5 // pred_check
      _
    $region10: #{odefunc_forward.1} parent=5 // pred_check_branch
      %272 = sbr.rel (%p269) target = $region12
    $region11: #{odefunc_forward.1} parent=5 // pred_region
      %s273 = ssub.s32 %s18, 1
      // Predicated region
      $region13: #{odefunc_forward.1} parent=11 // pred_check
        %p274 = pneg %p65
      $region14: #{odefunc_forward.1} parent=11 // pred_check_branch
        %276 = sbr.rel (%p274) target = $region16
      $region15: #{odefunc_forward.1} parent=11 // pred_region
        _
      $region16: #{odefunc_forward.1} parent=11 // pred_fallthru
        _
      // Predicated region
      $region17: #{odefunc_forward.1} parent=11 // pred_check
        %p277 = pneg %p86
      $region18: #{odefunc_forward.1} parent=11 // pred_check_branch
        %279 = sbr.rel (%p277) target = $region20
      $region19: #{odefunc_forward.1} parent=11 // pred_region
        _
      $region20: #{odefunc_forward.1} parent=11 // pred_fallthru
        _
      // Predicated region
      $region21: #{odefunc_forward.1} parent=11 // pred_check
        %p280 = pneg %p107
      $region22: #{odefunc_forward.1} parent=11 // pred_check_branch
        %282 = sbr.rel (%p280) target = $region24
      $region23: #{odefunc_forward.1} parent=11 // pred_region
        _
      $region24: #{odefunc_forward.1} parent=11 // pred_fallthru
        _
      // Predicated region
      $region25: #{odefunc_forward.1} parent=11 // pred_check
        %p283 = pneg %p128
      $region26: #{odefunc_forward.1} parent=11 // pred_check_branch
        %285 = sbr.rel (%p283) target = $region28
      $region27: #{odefunc_forward.1} parent=11 // pred_region
        _
      $region28: #{odefunc_forward.1} parent=11 // pred_fallthru
        _
      // Predicated region
      $region29: #{odefunc_forward.1} parent=11 // pred_check
        %p286 = pneg %p149
      $region30: #{odefunc_forward.1} parent=11 // pred_check_branch
        %288 = sbr.rel (%p286) target = $region32
      $region31: #{odefunc_forward.1} parent=11 // pred_region
        _
      $region32: #{odefunc_forward.1} parent=11 // pred_fallthru
        _
      // Predicated region
      $region33: #{odefunc_forward.1} parent=11 // pred_check
        %p289 = pneg %p170
      $region34: #{odefunc_forward.1} parent=11 // pred_check_branch
        %291 = sbr.rel (%p289) target = $region36
      $region35: #{odefunc_forward.1} parent=11 // pred_region
        _
      $region36: #{odefunc_forward.1} parent=11 // pred_fallthru
        _
      // Predicated region
      $region37: #{odefunc_forward.1} parent=11 // pred_check
        %p292 = pneg %p191
      $region38: #{odefunc_forward.1} parent=11 // pred_check_branch
        %294 = sbr.rel (%p292) target = $region40
      $region39: #{odefunc_forward.1} parent=11 // pred_region
        _
      $region40: #{odefunc_forward.1} parent=11 // pred_fallthru
        _
      // Predicated region
      $region41: #{odefunc_forward.1} parent=11 // pred_check
        %p295 = pneg %p212
      $region42: #{odefunc_forward.1} parent=11 // pred_check_branch
        %297 = sbr.rel (%p295) target = $region44
      $region43: #{odefunc_forward.1} parent=11 // pred_region
        _
      $region44: #{odefunc_forward.1} parent=11 // pred_fallthru
        _
      // Predicated region
      $region45: #{odefunc_forward.1} parent=11 // pred_check
        %p298 = pneg %p233
      $region46: #{odefunc_forward.1} parent=11 // pred_check_branch
        %300 = sbr.rel (%p298) target = $region48
      $region47: #{odefunc_forward.1} parent=11 // pred_region
        _
      $region48: #{odefunc_forward.1} parent=11 // pred_fallthru
        _
    $region12: #{odefunc_forward.1} parent=5 // pred_fallthru
      _
    %p301 = scmp.lt.s32.totalorder %s18, 2
    // Predicated region
    $region49: #{odefunc_forward.1} parent=5 // pred_check
      %p302 = pneg %p301
    $region50: #{odefunc_forward.1} parent=5 // pred_check_branch
      %304 = sbr.rel (%p302) target = $region52
    $region51: #{odefunc_forward.1} parent=5 // pred_region
      // Predicated region
      $region53: #{odefunc_forward.1} parent=51 // pred_check
        %p305 = pneg %p38
      $region54: #{odefunc_forward.1} parent=51 // pred_check_branch
        %307 = sbr.rel (%p305) target = $region56
      $region55: #{odefunc_forward.1} parent=51 // pred_region
        %s308 = smul.u32 4, %s18
        %p309 = scmp.lt.s32.totalorder %s308, 7
        %s310 = scalar_select %p309, %s308, 7
        %s311 = smul.addr %s310, 4
        %s312 = scalar_lea.vmem %s1, %s311
        %s313 = smul.u32 4, %s18
      $region56: #{odefunc_forward.1} parent=51 // pred_fallthru
        _
    $region52: #{odefunc_forward.1} parent=5 // pred_fallthru
      _
    %p314 = scmp.le.s32.totalorder 1, %s18
    %p315 = scmp.lt.s32.totalorder %s18, 3
    %p316 = pnand %p314, %p315
    %p317 = pneg %p316
    // Predicated region
    $region57: #{odefunc_forward.1} parent=5 // pred_check
      _
    $region58: #{odefunc_forward.1} parent=5 // pred_check_branch
      %319 = sbr.rel (%p316) target = $region60
    $region59: #{odefunc_forward.1} parent=5 // pred_region
      %s320 = ssub.s32 %s18, 1
      %s321 = smul.u32 4, %s23
      %p322 = scmp.lt.s32.totalorder %s321, 7
      %s323 = scalar_select %p322, %s321, 7
      %s324 = smul.addr %s323, 4
      %s325 = scalar_lea.vmem %s1, %s324
      %p326 = pneg %p44
      %p327 = pneg %p41
      %p328 = pneg %p65
      %p329 = pneg %p62
      %p330 = pneg %p86
      %p331 = pneg %p83
      %p332 = pneg %p107
      %p333 = pneg %p104
      %p334 = pneg %p128
      %p335 = pneg %p125
      %p336 = pneg %p149
      %p337 = pneg %p146
      %p338 = pneg %p170
      %p339 = pneg %p167
      %p340 = pneg %p191
      %p341 = pneg %p188
      %p342 = pneg %p212
      %p343 = pneg %p209
      %p344 = pneg %p233
      %p345 = pneg %p230
      %p346 = pneg %p259
      %p347 = pneg %p256
      %s348 = smul.u32 4, %s23
      %p349 = scmp.lt.s32.totalorder %s348, 7
      %s350 = scalar_select %p349, %s348, 7
      %s351 = smul.addr %s350, 4
      %s352 = scalar_lea.vmem %s11, %s351
      %s353 = smul.u32 4, %s23
      %p354 = scmp.lt.s32.totalorder %s353, 7
      %s355 = scalar_select %p354, %s353, 7
      %s356 = smul.addr %s355, 4
      %s357 = scalar_lea.vmem %s1, %s356
      %s358 = smul.u32 4, %s23
      %s359 = smul.u32 4, %s23
      %p360 = scmp.lt.s32.totalorder %s359, 7
      %s361 = scalar_select %p360, %s359, 7
      %s362 = smul.addr %s361, 4
      %s363 = scalar_lea.vmem %s11, %s362
      %s364 = smul.u32 4, %s23
      %v366 = vld [vmem:[%s357] sm:$0x77]
      %v367 = vld [vmem:[%s357 + $0x8] sm:$0x77]
      %v368 = vld [vmem:[%s2] sm:$0xff]
      %v369 = vld [vmem:[%s2 + $0x8] sm:$0xff]
      %v370 = vld [vmem:[%s2 + $0x10] sm:$0xff]
      %v371 = vld [vmem:[%s2 + $0x18] sm:$0xff]
      %v372 = vld [vmem:[%s2 + $0x20] sm:$0xff]
      %v373 = vld [vmem:[%s2 + $0x28] sm:$0xff]
      %v374 = vld [vmem:[%s2 + $0x30] sm:$0x3]
      %v375 = vld [vmem:[%s3] sm:$0xff]
      %v376 = vld [vmem:[%s3 + $0x8] sm:$0xff]
      %v377 = vld [vmem:[%s3 + $0x10] sm:$0xff]
      %v378 = vld [vmem:[%s3 + $0x18] sm:$0xff]
      %v379 = vld [vmem:[%s3 + $0x20] sm:$0xff]
      %v380 = vld [vmem:[%s3 + $0x28] sm:$0xff]
      %v381 = vld [vmem:[%s3 + $0x30] sm:$0x3]
      %s382 = sld [smem:[#allocation3]]
      %s383 = ssub.f32 %s382, 0.5
      %v384 = vld [vmem:[%s4] sm:$0xff]
      %v385 = vld [vmem:[%s4 + $0x8] sm:$0xff]
      %v386 = vld [vmem:[%s4 + $0x10] sm:$0xff]
      %v387 = vld [vmem:[%s4 + $0x18] sm:$0xff]
      %v388 = vld [vmem:[%s4 + $0x20] sm:$0xff]
      %v389 = vld [vmem:[%s4 + $0x28] sm:$0xff]
      %v390 = vld [vmem:[%s4 + $0x30] sm:$0x3]
      %v391 = vstv %s383
      %v392 = vmul.f32 %v391, %v384
      %v393 = vmul.f32 %v391, %v385
      %v394 = vmul.f32 %v391, %v386
      %v395 = vmul.f32 %v391, %v387
      %v396 = vmul.f32 %v391, %v388
      %v397 = vmul.f32 %v391, %v389
      %v398 = vmul.f32 %v391, %v390
      %v399 = vadd.f32 %v375, %v392
      %v400 = vadd.f32 %v376, %v393
      %v401 = vadd.f32 %v377, %v394
      %v402 = vadd.f32 %v378, %v395
      %v403 = vadd.f32 %v379, %v396
      %v404 = vadd.f32 %v380, %v397
      %v405 = vadd.f32 %v381, %v398
      %407 = vset.pattern.permute.xlu0 0
      %408 = vperm.xlu0 %407, %v368
      %v409 = vpop.permute.xlu0 %408
      %412 = vset.pattern.permute.xlu0 0
      %413 = vperm.xlu0 %412, %v369
      %v414 = vpop.permute.xlu0 %413
      %417 = vset.pattern.permute.xlu0 0
      %418 = vperm.xlu0 %417, %v370
      %v419 = vpop.permute.xlu0 %418
      %422 = vset.pattern.permute.xlu0 0
      %423 = vperm.xlu0 %422, %v371
      %v424 = vpop.permute.xlu0 %423
      %427 = vset.pattern.permute.xlu0 0
      %428 = vperm.xlu0 %427, %v372
      %v429 = vpop.permute.xlu0 %428
      %432 = vset.pattern.permute.xlu0 0
      %433 = vperm.xlu0 %432, %v373
      %v434 = vpop.permute.xlu0 %433
      %437 = vset.pattern.permute.xlu0 0
      %438 = vperm.xlu0 %437, %v374
      %v439 = vpop.permute.xlu0 %438
      %v443 = vlaneseq
      %v444 = vshrl.u32 %v443, 7
      %v445 = vsub.s32 0, %v444
      %v446 = vrot.slane %v366, %v445
      %v447 = vlaneseq
      %v448 = vshrl.u32 %v447, 7
      %v449 = vsub.s32 4, %v448
      %v450 = vrot.slane %v366, %v449
      %v451 = vlaneseq
      %v452 = vshrl.u32 %v451, 7
      %v453 = vsub.s32 0, %v452
      %v454 = vrot.slane %v367, %v453
      %v455 = vlaneseq
      %v456 = vshrl.u32 %v455, 7
      %v457 = vsub.s32 4, %v456
      %v458 = vrot.slane %v367, %v457
      %v463 = vlaneseq
      %v464 = vshrl.u32 %v463, 7
      %v465 = vsub.s32 0, %v464
      %v466 = vrot.slane %v446, %v465
      %v467 = vlaneseq
      %v468 = vshrl.u32 %v467, 7
      %v469 = vsub.s32 0, %v468
      %v470 = vrot.slane %v450, %v469
      %v471 = vlaneseq
      %v472 = vshrl.u32 %v471, 7
      %v473 = vsub.s32 0, %v472
      %v474 = vrot.slane %v454, %v473
      %v475 = vlaneseq
      %v476 = vshrl.u32 %v475, 7
      %v477 = vsub.s32 0, %v476
      %v478 = vrot.slane %v458, %v477
      %v479 = vmul.f32 %v409, %v466
      %v480 = vmul.f32 %v409, %v470
      %v481 = vmul.f32 %v409, %v474
      %v482 = vmul.f32 %v409, %v478
      %v483 = vmul.f32 %v414, %v466
      %v484 = vmul.f32 %v414, %v470
      %v485 = vmul.f32 %v414, %v474
      %v486 = vmul.f32 %v414, %v478
      %v487 = vmul.f32 %v419, %v466
      %v488 = vmul.f32 %v419, %v470
      %v489 = vmul.f32 %v419, %v474
      %v490 = vmul.f32 %v419, %v478
      %v491 = vmul.f32 %v424, %v466
      %v492 = vmul.f32 %v424, %v470
      %v493 = vmul.f32 %v424, %v474
      %v494 = vmul.f32 %v424, %v478
      %v495 = vmul.f32 %v429, %v466
      %v496 = vmul.f32 %v429, %v470
      %v497 = vmul.f32 %v429, %v474
      %v498 = vmul.f32 %v429, %v478
      %v499 = vmul.f32 %v434, %v466
      %v500 = vmul.f32 %v434, %v470
      %v501 = vmul.f32 %v434, %v474
      %v502 = vmul.f32 %v434, %v478
      %v503 = vmul.f32 %v439, %v466
      %v504 = vmul.f32 %v439, %v470
      %v505 = vmul.f32 %v439, %v474
      %v506 = vmul.f32 %v439, %v478
      %507 = vset.pattern.permute.xlu0 1
      %508 = vperm.xlu0 %507, %v368
      %v509 = vpop.permute.xlu0 %508
      %511 = vset.pattern.permute.xlu0 1
      %512 = vperm.xlu0 %511, %v369
      %v513 = vpop.permute.xlu0 %512
      %515 = vset.pattern.permute.xlu0 1
      %516 = vperm.xlu0 %515, %v370
      %v517 = vpop.permute.xlu0 %516
      %519 = vset.pattern.permute.xlu0 1
      %520 = vperm.xlu0 %519, %v371
      %v521 = vpop.permute.xlu0 %520
      %523 = vset.pattern.permute.xlu0 1
      %524 = vperm.xlu0 %523, %v372
      %v525 = vpop.permute.xlu0 %524
      %527 = vset.pattern.permute.xlu0 1
      %528 = vperm.xlu0 %527, %v373
      %v529 = vpop.permute.xlu0 %528
      %531 = vset.pattern.permute.xlu0 1
      %532 = vperm.xlu0 %531, %v374
      %v533 = vpop.permute.xlu0 %532
      %v535 = vlaneseq
      %v536 = vshrl.u32 %v535, 7
      %v537 = vsub.s32 1, %v536
      %v538 = vrot.slane %v366, %v537
      %v539 = vlaneseq
      %v540 = vshrl.u32 %v539, 7
      %v541 = vsub.s32 5, %v540
      %v542 = vrot.slane %v366, %v541
      %v543 = vlaneseq
      %v544 = vshrl.u32 %v543, 7
      %v545 = vsub.s32 1, %v544
      %v546 = vrot.slane %v367, %v545
      %v547 = vlaneseq
      %v548 = vshrl.u32 %v547, 7
      %v549 = vsub.s32 5, %v548
      %v550 = vrot.slane %v367, %v549
      %v555 = vlaneseq
      %v556 = vshrl.u32 %v555, 7
      %v557 = vsub.s32 1, %v556
      %v558 = vrot.slane %v538, %v557
      %v559 = vlaneseq
      %v560 = vshrl.u32 %v559, 7
      %v561 = vsub.s32 1, %v560
      %v562 = vrot.slane %v542, %v561
      %v563 = vlaneseq
      %v564 = vshrl.u32 %v563, 7
      %v565 = vsub.s32 1, %v564
      %v566 = vrot.slane %v546, %v565
      %v567 = vlaneseq
      %v568 = vshrl.u32 %v567, 7
      %v569 = vsub.s32 1, %v568
      %v570 = vrot.slane %v550, %v569
      %v571 = vmul.f32 %v509, %v558
      %v572 = vmul.f32 %v509, %v562
      %v573 = vmul.f32 %v509, %v566
      %v574 = vmul.f32 %v509, %v570
      %v575 = vmul.f32 %v513, %v558
      %v576 = vmul.f32 %v513, %v562
      %v577 = vmul.f32 %v513, %v566
      %v578 = vmul.f32 %v513, %v570
      %v579 = vmul.f32 %v517, %v558
      %v580 = vmul.f32 %v517, %v562
      %v581 = vmul.f32 %v517, %v566
      %v582 = vmul.f32 %v517, %v570
      %v583 = vmul.f32 %v521, %v558
      %v584 = vmul.f32 %v521, %v562
      %v585 = vmul.f32 %v521, %v566
      %v586 = vmul.f32 %v521, %v570
      %v587 = vmul.f32 %v525, %v558
      %v588 = vmul.f32 %v525, %v562
      %v589 = vmul.f32 %v525, %v566
      %v590 = vmul.f32 %v525, %v570
      %v591 = vmul.f32 %v529, %v558
      %v592 = vmul.f32 %v529, %v562
      %v593 = vmul.f32 %v529, %v566
      %v594 = vmul.f32 %v529, %v570
      %v595 = vmul.f32 %v533, %v558
      %v596 = vmul.f32 %v533, %v562
      %v597 = vmul.f32 %v533, %v566
      %v598 = vmul.f32 %v533, %v570
      %v599 = vadd.f32 %v479, %v571
      %v600 = vadd.f32 %v480, %v572
      %v601 = vadd.f32 %v481, %v573
      %v602 = vadd.f32 %v482, %v574
      %v603 = vadd.f32 %v483, %v575
      %v604 = vadd.f32 %v484, %v576
      %v605 = vadd.f32 %v485, %v577
      %v606 = vadd.f32 %v486, %v578
      %v607 = vadd.f32 %v487, %v579
      %v608 = vadd.f32 %v488, %v580
      %v609 = vadd.f32 %v489, %v581
      %v610 = vadd.f32 %v490, %v582
      %v611 = vadd.f32 %v491, %v583
      %v612 = vadd.f32 %v492, %v584
      %v613 = vadd.f32 %v493, %v585
      %v614 = vadd.f32 %v494, %v586
      %v615 = vadd.f32 %v495, %v587
      %v616 = vadd.f32 %v496, %v588
      %v617 = vadd.f32 %v497, %v589
      %v618 = vadd.f32 %v498, %v590
      %v619 = vadd.f32 %v499, %v591
      %v620 = vadd.f32 %v500, %v592
      %v621 = vadd.f32 %v501, %v593
      %v622 = vadd.f32 %v502, %v594
      %v623 = vadd.f32 %v503, %v595
      %v624 = vadd.f32 %v504, %v596
      %v625 = vadd.f32 %v505, %v597
      %v626 = vadd.f32 %v506, %v598
      %627 = vset.pattern.permute.xlu0 2
      %628 = vperm.xlu0 %627, %v368
      %v629 = vpop.permute.xlu0 %628
      %631 = vset.pattern.permute.xlu0 2
      %632 = vperm.xlu0 %631, %v369
      %v633 = vpop.permute.xlu0 %632
      %635 = vset.pattern.permute.xlu0 2
      %636 = vperm.xlu0 %635, %v370
      %v637 = vpop.permute.xlu0 %636
      %639 = vset.pattern.permute.xlu0 2
      %640 = vperm.xlu0 %639, %v371
      %v641 = vpop.permute.xlu0 %640
      %643 = vset.pattern.permute.xlu0 2
      %644 = vperm.xlu0 %643, %v372
      %v645 = vpop.permute.xlu0 %644
      %647 = vset.pattern.permute.xlu0 2
      %648 = vperm.xlu0 %647, %v373
      %v649 = vpop.permute.xlu0 %648
      %651 = vset.pattern.permute.xlu0 2
      %652 = vperm.xlu0 %651, %v374
      %v653 = vpop.permute.xlu0 %652
      %v655 = vlaneseq
      %v656 = vshrl.u32 %v655, 7
      %v657 = vsub.s32 2, %v656
      %v658 = vrot.slane %v366, %v657
      %v659 = vlaneseq
      %v660 = vshrl.u32 %v659, 7
      %v661 = vsub.s32 6, %v660
      %v662 = vrot.slane %v366, %v661
      %v663 = vlaneseq
      %v664 = vshrl.u32 %v663, 7
      %v665 = vsub.s32 2, %v664
      %v666 = vrot.slane %v367, %v665
      %v667 = vlaneseq
      %v668 = vshrl.u32 %v667, 7
      %v669 = vsub.s32 6, %v668
      %v670 = vrot.slane %v367, %v669
      %v675 = vlaneseq
      %v676 = vshrl.u32 %v675, 7
      %v677 = vsub.s32 2, %v676
      %v678 = vrot.slane %v658, %v677
      %v679 = vlaneseq
      %v680 = vshrl.u32 %v679, 7
      %v681 = vsub.s32 2, %v680
      %v682 = vrot.slane %v662, %v681
      %v683 = vlaneseq
      %v684 = vshrl.u32 %v683, 7
      %v685 = vsub.s32 2, %v684
      %v686 = vrot.slane %v666, %v685
      %v687 = vlaneseq
      %v688 = vshrl.u32 %v687, 7
      %v689 = vsub.s32 2, %v688
      %v690 = vrot.slane %v670, %v689
      %v691 = vmul.f32 %v629, %v678
      %v692 = vmul.f32 %v629, %v682
      %v693 = vmul.f32 %v629, %v686
      %v694 = vmul.f32 %v629, %v690
      %v695 = vmul.f32 %v633, %v678
      %v696 = vmul.f32 %v633, %v682
      %v697 = vmul.f32 %v633, %v686
      %v698 = vmul.f32 %v633, %v690
      %v699 = vmul.f32 %v637, %v678
      %v700 = vmul.f32 %v637, %v682
      %v701 = vmul.f32 %v637, %v686
      %v702 = vmul.f32 %v637, %v690
      %v703 = vmul.f32 %v641, %v678
      %v704 = vmul.f32 %v641, %v682
      %v705 = vmul.f32 %v641, %v686
      %v706 = vmul.f32 %v641, %v690
      %v707 = vmul.f32 %v645, %v678
      %v708 = vmul.f32 %v645, %v682
      %v709 = vmul.f32 %v645, %v686
      %v710 = vmul.f32 %v645, %v690
      %v711 = vmul.f32 %v649, %v678
      %v712 = vmul.f32 %v649, %v682
      %v713 = vmul.f32 %v649, %v686
      %v714 = vmul.f32 %v649, %v690
      %v715 = vmul.f32 %v653, %v678
      %v716 = vmul.f32 %v653, %v682
      %v717 = vmul.f32 %v653, %v686
      %v718 = vmul.f32 %v653, %v690
      %v719 = vadd.f32 %v599, %v691
      %v720 = vadd.f32 %v600, %v692
      %v721 = vadd.f32 %v601, %v693
      %v722 = vadd.f32 %v602, %v694
      %v723 = vadd.f32 %v603, %v695
      %v724 = vadd.f32 %v604, %v696
      %v725 = vadd.f32 %v605, %v697
      %v726 = vadd.f32 %v606, %v698
      %v727 = vadd.f32 %v607, %v699
      %v728 = vadd.f32 %v608, %v700
      %v729 = vadd.f32 %v609, %v701
      %v730 = vadd.f32 %v610, %v702
      %v731 = vadd.f32 %v611, %v703
      %v732 = vadd.f32 %v612, %v704
      %v733 = vadd.f32 %v613, %v705
      %v734 = vadd.f32 %v614, %v706
      %v735 = vadd.f32 %v615, %v707
      %v736 = vadd.f32 %v616, %v708
      %v737 = vadd.f32 %v617, %v709
      %v738 = vadd.f32 %v618, %v710
      %v739 = vadd.f32 %v619, %v711
      %v740 = vadd.f32 %v620, %v712
      %v741 = vadd.f32 %v621, %v713
      %v742 = vadd.f32 %v622, %v714
      %v743 = vadd.f32 %v623, %v715
      %v744 = vadd.f32 %v624, %v716
      %v745 = vadd.f32 %v625, %v717
      %v746 = vadd.f32 %v626, %v718
      %748 = vset.pattern.permute.xlu0 0
      %749 = vperm.xlu0 %748, %v399
      %v750 = vpop.permute.xlu0 %749
      %753 = vset.pattern.permute.xlu0 0
      %754 = vperm.xlu0 %753, %v400
      %v755 = vpop.permute.xlu0 %754
      %758 = vset.pattern.permute.xlu0 0
      %759 = vperm.xlu0 %758, %v401
      %v760 = vpop.permute.xlu0 %759
      %763 = vset.pattern.permute.xlu0 0
      %764 = vperm.xlu0 %763, %v402
      %v765 = vpop.permute.xlu0 %764
      %768 = vset.pattern.permute.xlu0 0
      %769 = vperm.xlu0 %768, %v403
      %v770 = vpop.permute.xlu0 %769
      %773 = vset.pattern.permute.xlu0 0
      %774 = vperm.xlu0 %773, %v404
      %v775 = vpop.permute.xlu0 %774
      %778 = vset.pattern.permute.xlu0 0
      %779 = vperm.xlu0 %778, %v405
      %v780 = vpop.permute.xlu0 %779
      %v782 = vadd.f32 %v719, %v750
      %v783 = vadd.f32 %v720, %v750
      %v784 = vadd.f32 %v721, %v750
      %v785 = vadd.f32 %v722, %v750
      %v786 = vadd.f32 %v723, %v755
      %v787 = vadd.f32 %v724, %v755
      %v788 = vadd.f32 %v725, %v755
      %v789 = vadd.f32 %v726, %v755
      %v790 = vadd.f32 %v727, %v760
      %v791 = vadd.f32 %v728, %v760
      %v792 = vadd.f32 %v729, %v760
      %v793 = vadd.f32 %v730, %v760
      %v794 = vadd.f32 %v731, %v765
      %v795 = vadd.f32 %v732, %v765
      %v796 = vadd.f32 %v733, %v765
      %v797 = vadd.f32 %v734, %v765
      %v798 = vadd.f32 %v735, %v770
      %v799 = vadd.f32 %v736, %v770
      %v800 = vadd.f32 %v737, %v770
      %v801 = vadd.f32 %v738, %v770
      %v802 = vadd.f32 %v739, %v775
      %v803 = vadd.f32 %v740, %v775
      %v804 = vadd.f32 %v741, %v775
      %v805 = vadd.f32 %v742, %v775
      %v806 = vadd.f32 %v743, %v780
      %v807 = vadd.f32 %v744, %v780
      %v808 = vadd.f32 %v745, %v780
      %v809 = vadd.f32 %v746, %v780
      %v810 = vmax.f32 %v782, 0.0
      %v811 = vmax.f32 %v783, 0.0
      %v812 = vmax.f32 %v784, 0.0
      %v813 = vmax.f32 %v785, 0.0
      %v814 = vmax.f32 %v786, 0.0
      %v815 = vmax.f32 %v787, 0.0
      %v816 = vmax.f32 %v788, 0.0
      %v817 = vmax.f32 %v789, 0.0
      %v818 = vmax.f32 %v790, 0.0
      %v819 = vmax.f32 %v791, 0.0
      %v820 = vmax.f32 %v792, 0.0
      %v821 = vmax.f32 %v793, 0.0
      %v822 = vmax.f32 %v794, 0.0
      %v823 = vmax.f32 %v795, 0.0
      %v824 = vmax.f32 %v796, 0.0
      %v825 = vmax.f32 %v797, 0.0
      %v826 = vmax.f32 %v798, 0.0
      %v827 = vmax.f32 %v799, 0.0
      %v828 = vmax.f32 %v800, 0.0
      %v829 = vmax.f32 %v801, 0.0
      %v830 = vmax.f32 %v802, 0.0
      %v831 = vmax.f32 %v803, 0.0
      %v832 = vmax.f32 %v804, 0.0
      %v833 = vmax.f32 %v805, 0.0
      %v834 = vmax.f32 %v806, 0.0
      %v835 = vmax.f32 %v807, 0.0
      %v836 = vmax.f32 %v808, 0.0
      %v837 = vmax.f32 %v809, 0.0
      %v838 = vpack.c.bf16 %v814, %v810
      %v839 = vpack.c.bf16 %v815, %v811
      %v840 = vpack.c.bf16 %v816, %v812
      %v841 = vpack.c.bf16 %v817, %v813
      %v842 = vpack.c.bf16 %v822, %v818
      %v843 = vpack.c.bf16 %v823, %v819
      %v844 = vpack.c.bf16 %v824, %v820
      %v845 = vpack.c.bf16 %v825, %v821
      %v846 = vpack.c.bf16 %v830, %v826
      %v847 = vpack.c.bf16 %v831, %v827
      %v848 = vpack.c.bf16 %v832, %v828
      %v849 = vpack.c.bf16 %v833, %v829
      %v850 = vpack.c.bf16 %v834, %v834
      %v851 = vpack.c.bf16 %v835, %v835
      %v852 = vpack.c.bf16 %v836, %v836
      %v853 = vpack.c.bf16 %v837, %v837
      %v854 = vld [vmem:[%s5] sm:$0xf]
      %v855 = vld [vmem:[%s5 + $0x4] sm:$0xf]
      %v856 = vld [vmem:[%s5 + $0x8] sm:$0xf]
      %v857 = vld [vmem:[%s5 + $0xc] sm:$0xf]
      %v858 = vld [vmem:[%s5 + $0x10] sm:$0xf]
      %v859 = vld [vmem:[%s5 + $0x14] sm:$0xf]
      %v860 = vld [vmem:[%s5 + $0x18] sm:$0x1]
      %v861 = vld [vmem:[%s6] sm:$0xff]
      %v862 = vld [vmem:[%s6 + $0x8] sm:$0xff]
      %v863 = vld [vmem:[%s6 + $0x10] sm:$0xff]
      %v864 = vld [vmem:[%s6 + $0x18] sm:$0xff]
      %v865 = vld [vmem:[%s6 + $0x20] sm:$0xff]
      %v866 = vld [vmem:[%s6 + $0x28] sm:$0xff]
      %v867 = vld [vmem:[%s6 + $0x30] sm:$0x3]
      %869 = vset.pattern.permute.xlu0 0
      %870 = vperm.xlu0 %869, %v861
      %v871 = vpop.permute.xlu0 %870
      %874 = vset.pattern.permute.xlu0 0
      %875 = vperm.xlu0 %874, %v862
      %v876 = vpop.permute.xlu0 %875
      %879 = vset.pattern.permute.xlu0 0
      %880 = vperm.xlu0 %879, %v863
      %v881 = vpop.permute.xlu0 %880
      %884 = vset.pattern.permute.xlu0 0
      %885 = vperm.xlu0 %884, %v864
      %v886 = vpop.permute.xlu0 %885
      %889 = vset.pattern.permute.xlu0 0
      %890 = vperm.xlu0 %889, %v865
      %v891 = vpop.permute.xlu0 %890
      %894 = vset.pattern.permute.xlu0 0
      %895 = vperm.xlu0 %894, %v866
      %v896 = vpop.permute.xlu0 %895
      %899 = vset.pattern.permute.xlu0 0
      %900 = vperm.xlu0 %899, %v867
      %v901 = vpop.permute.xlu0 %900
      %v910 = vunpack.c.l.b16 %v854
      %v911 = vunpack.c.l.b16 %v855
      %v912 = vunpack.c.l.b16 %v856
      %v913 = vunpack.c.l.b16 %v857
      %v914 = vunpack.c.l.b16 %v858
      %v915 = vunpack.c.l.b16 %v859
      %v916 = vunpack.c.l.b16 %v860
      %v917 = vpack.c.b16 %v911, %v910
      %v918 = vpack.c.b16 %v913, %v912
      %v919 = vpack.c.b16 %v915, %v914
      %v920 = vpack.c.b16 %v916, %v916
      %vm921 = vcmask 408576
      %v923 = vsel %vm921, %v917, 0
      %v926 = vsel %vm921, %v918, 0
      %v929 = vsel %vm921, %v919, 0
      %v932 = vsel %vm921, %v920, 0
      %vm934 = vcmask 1040384
      %v936 = vsel %vm934, %v850, 0
      %v939 = vsel %vm934, %v851, 0
      %v942 = vsel %vm934, %v852, 0
      %v945 = vsel %vm934, %v853, 0
      %947 = vmatprep.subr.bf16.mxu0 %v839
      %948 = vmatpush1.bf16.msra.mxu0 %v838
      %949 = vmatprep.subr.bf16.mxu0 %v843
      %950 = vmatpush1.bf16.msra.mxu0 %v842
      %951 = vmatprep.subr.bf16.mxu0 %v847
      %952 = vmatpush1.bf16.msra.mxu0 %v846
      %953 = vmatprep.subr.bf16.mxu0 %v939
      %954 = vmatpush1.bf16.msra.mxu0 %v936
      %955 = vmatprep.subr.bf16.mxu0 0
      %956 = vmatpush1.bf16.msra.mxu0 0
      %957 = vmatprep.subr.bf16.mxu0 0
      %958 = vmatpush1.bf16.msra.mxu0 0
      %959 = vmatprep.subr.bf16.mxu0 0
      %960 = vmatpush1.bf16.msra.mxu0 0
      %961 = vmatprep.subr.bf16.mxu0 0
      %962 = vmatpush1.bf16.msra.mxu0 0
      %963 = vmatprep.subr.bf16.mxu0 0
      %964 = vmatpush1.bf16.msra.mxu0 0
      %965 = vmatprep.subr.bf16.mxu0 0
      %966 = vmatpush1.bf16.msra.mxu0 0
      %967 = vmatprep.subr.bf16.mxu0 0
      %968 = vmatpush1.bf16.msra.mxu0 0
      %969 = vmatprep.subr.bf16.mxu0 0
      %970 = vmatpush1.bf16.msra.mxu0 0
      %971 = vmatprep.subr.bf16.mxu0 0
      %972 = vmatpush1.bf16.msra.mxu0 0
      %973 = vmatprep.subr.bf16.mxu0 0
      %974 = vmatpush1.bf16.msra.mxu0 0
      %975 = vmatprep.subr.bf16.mxu0 0
      %976 = vmatpush1.bf16.msra.mxu0 0
      %977 = vmatprep.subr.bf16.mxu0 0
      %978 = vmatpush1.bf16.msra.mxu0 0
      %979 = vmatprep.mubr.bf16.mxu0 0
      %980 = vmatmul.mubr.bf16.gmra.mrb[0].mxu0 %v923
      %v981 = vpop.f32.mrb[0].mxu0
      %v982 = vadd.f32 %v871, %v981
      %v983 = vpop.f32.mrb[0].mxu0
      %v984 = vadd.f32 %v871, %v983
      %v985 = vpop.f32.mrb[0].mxu0
      %v986 = vadd.f32 %v876, %v985
      %v987 = vpop.f32.mrb[0].mxu0
      %v988 = vadd.f32 %v876, %v987
      %989 = vmatprep.mubr.bf16.mxu0 0
      %990 = vmatmul.mubr.bf16.gmra.mrb[0].mxu0 %v926
      %v991 = vpop.f32.mrb[0].mxu0
      %v992 = vadd.f32 %v881, %v991
      %v993 = vpop.f32.mrb[0].mxu0
      %v994 = vadd.f32 %v881, %v993
      %v995 = vpop.f32.mrb[0].mxu0
      %v996 = vadd.f32 %v886, %v995
      %v997 = vpop.f32.mrb[0].mxu0
      %v998 = vadd.f32 %v886, %v997
      %999 = vmatprep.mubr.bf16.mxu0 0
      %1000 = vmatmul.mubr.bf16.gmra.mrb[0].mxu0 %v929
      %v1001 = vpop.f32.mrb[0].mxu0
      %v1002 = vadd.f32 %v891, %v1001
      %v1003 = vpop.f32.mrb[0].mxu0
      %v1004 = vadd.f32 %v891, %v1003
      %v1005 = vpop.f32.mrb[0].mxu0
      %v1006 = vadd.f32 %v896, %v1005
      %v1007 = vpop.f32.mrb[0].mxu0
      %v1008 = vadd.f32 %v896, %v1007
      %1009 = vmatprep.mubr.bf16.mxu0 0
      %1010 = vmatmul.mubr.bf16.gmra.mrb[0].mxu0 %v932
      %v1011 = vpop.f32.mrb[0].mxu0
      %v1012 = vadd.f32 %v901, %v1011
      %v1013 = vpop.f32.mrb[0].mxu0
      %v1014 = vadd.f32 %v901, %v1013
      %v1015 = vpop.f32.mrb[0].mxu0
      %v1016 = vpop.f32.mrb[0].mxu0
      %1017 = vdwg.mxu0
      %1018 = vmatprep.subr.bf16.mxu0 %v841
      %1019 = vmatpush1.bf16.msra.mxu0 %v840
      %1020 = vmatprep.subr.bf16.mxu0 %v845
      %1021 = vmatpush1.bf16.msra.mxu0 %v844
      %1022 = vmatprep.subr.bf16.mxu0 %v849
      %1023 = vmatpush1.bf16.msra.mxu0 %v848
      %1024 = vmatprep.subr.bf16.mxu0 %v945
      %1025 = vmatpush1.bf16.msra.mxu0 %v942
      %1026 = vmatprep.subr.bf16.mxu0 0
      %1027 = vmatpush1.bf16.msra.mxu0 0
      %1028 = vmatprep.subr.bf16.mxu0 0
      %1029 = vmatpush1.bf16.msra.mxu0 0
      %1030 = vmatprep.subr.bf16.mxu0 0
      %1031 = vmatpush1.bf16.msra.mxu0 0
      %1032 = vmatprep.subr.bf16.mxu0 0
      %1033 = vmatpush1.bf16.msra.mxu0 0
      %1034 = vmatprep.subr.bf16.mxu0 0
      %1035 = vmatpush1.bf16.msra.mxu0 0
      %1036 = vmatprep.subr.bf16.mxu0 0
      %1037 = vmatpush1.bf16.msra.mxu0 0
      %1038 = vmatprep.subr.bf16.mxu0 0
      %1039 = vmatpush1.bf16.msra.mxu0 0
      %1040 = vmatprep.subr.bf16.mxu0 0
      %1041 = vmatpush1.bf16.msra.mxu0 0
      %1042 = vmatprep.subr.bf16.mxu0 0
      %1043 = vmatpush1.bf16.msra.mxu0 0
      %1044 = vmatprep.subr.bf16.mxu0 0
      %1045 = vmatpush1.bf16.msra.mxu0 0
      %1046 = vmatprep.subr.bf16.mxu0 0
      %1047 = vmatpush1.bf16.msra.mxu0 0
      %1048 = vmatprep.subr.bf16.mxu0 0
      %1049 = vmatpush1.bf16.msra.mxu0 0
      %1050 = vmatprep.mubr.bf16.mxu0 0
      %1051 = vmatmul.mubr.bf16.gmra.mrb[0].mxu0 %v923
      %v1052 = vpop.f32.mrb[0].mxu0
      %v1053 = vadd.f32 %v871, %v1052
      %v1054 = vpop.f32.mrb[0].mxu0
      %v1055 = vadd.f32 %v871, %v1054
      %v1056 = vpop.f32.mrb[0].mxu0
      %v1057 = vadd.f32 %v876, %v1056
      %v1058 = vpop.f32.mrb[0].mxu0
      %v1059 = vadd.f32 %v876, %v1058
      %1060 = vmatprep.mubr.bf16.mxu0 0
      %1061 = vmatmul.mubr.bf16.gmra.mrb[0].mxu0 %v926
      %v1062 = vpop.f32.mrb[0].mxu0
      %v1063 = vadd.f32 %v881, %v1062
      %v1064 = vpop.f32.mrb[0].mxu0
      %v1065 = vadd.f32 %v881, %v1064
      %v1066 = vpop.f32.mrb[0].mxu0
      %v1067 = vadd.f32 %v886, %v1066
      %v1068 = vpop.f32.mrb[0].mxu0
      %v1069 = vadd.f32 %v886, %v1068
      %1070 = vmatprep.mubr.bf16.mxu0 0
      %1071 = vmatmul.mubr.bf16.gmra.mrb[0].mxu0 %v929
      %v1072 = vpop.f32.mrb[0].mxu0
      %v1073 = vadd.f32 %v891, %v1072
      %v1074 = vpop.f32.mrb[0].mxu0
      %v1075 = vadd.f32 %v891, %v1074
      %v1076 = vpop.f32.mrb[0].mxu0
      %v1077 = vadd.f32 %v896, %v1076
      %v1078 = vpop.f32.mrb[0].mxu0
      %v1079 = vadd.f32 %v896, %v1078
      %1080 = vmatprep.mubr.bf16.mxu0 0
      %1081 = vmatmul.mubr.bf16.gmra.mrb[0].mxu0 %v932
      %v1082 = vpop.f32.mrb[0].mxu0
      %v1083 = vadd.f32 %v901, %v1082
      %v1084 = vpop.f32.mrb[0].mxu0
      %v1085 = vadd.f32 %v901, %v1084
      %v1086 = vpop.f32.mrb[0].mxu0
      %v1087 = vpop.f32.mrb[0].mxu0
      %1088 = vdwg.mxu0
      %v1089 = vmax.f32 %v982, 0.0
      %v1090 = vmax.f32 %v984, 0.0
      %v1091 = vmax.f32 %v1053, 0.0
      %v1092 = vmax.f32 %v1055, 0.0
      %v1093 = vmax.f32 %v986, 0.0
      %v1094 = vmax.f32 %v988, 0.0
      %v1095 = vmax.f32 %v1057, 0.0
      %v1096 = vmax.f32 %v1059, 0.0
      %v1097 = vmax.f32 %v992, 0.0
      %v1098 = vmax.f32 %v994, 0.0
      %v1099 = vmax.f32 %v1063, 0.0
      %v1100 = vmax.f32 %v1065, 0.0
      %v1101 = vmax.f32 %v996, 0.0
      %v1102 = vmax.f32 %v998, 0.0
      %v1103 = vmax.f32 %v1067, 0.0
      %v1104 = vmax.f32 %v1069, 0.0
      %v1105 = vmax.f32 %v1002, 0.0
      %v1106 = vmax.f32 %v1004, 0.0
      %v1107 = vmax.f32 %v1073, 0.0
      %v1108 = vmax.f32 %v1075, 0.0
      %v1109 = vmax.f32 %v1006, 0.0
      %v1110 = vmax.f32 %v1008, 0.0
      %v1111 = vmax.f32 %v1077, 0.0
      %v1112 = vmax.f32 %v1079, 0.0
      %v1113 = vmax.f32 %v1012, 0.0
      %v1114 = vmax.f32 %v1014, 0.0
      %v1115 = vmax.f32 %v1083, 0.0
      %v1116 = vmax.f32 %v1085, 0.0
      %v1117 = vpack.c.bf16 %v1093, %v1089
      %v1118 = vpack.c.bf16 %v1094, %v1090
      %v1119 = vpack.c.bf16 %v1095, %v1091
      %v1120 = vpack.c.bf16 %v1096, %v1092
      %v1121 = vpack.c.bf16 %v1101, %v1097
      %v1122 = vpack.c.bf16 %v1102, %v1098
      %v1123 = vpack.c.bf16 %v1103, %v1099
      %v1124 = vpack.c.bf16 %v1104, %v1100
      %v1125 = vpack.c.bf16 %v1109, %v1105
      %v1126 = vpack.c.bf16 %v1110, %v1106
      %v1127 = vpack.c.bf16 %v1111, %v1107
      %v1128 = vpack.c.bf16 %v1112, %v1108
      %v1129 = vpack.c.bf16 %v1113, %v1113
      %v1130 = vpack.c.bf16 %v1114, %v1114
      %v1131 = vpack.c.bf16 %v1115, %v1115
      %v1132 = vpack.c.bf16 %v1116, %v1116
      %v1133 = vld [vmem:[%s7] sm:$0xf]
      %v1134 = vld [vmem:[%s7 + $0x4] sm:$0xf]
      %v1135 = vld [vmem:[%s7 + $0x8] sm:$0xf]
      %v1136 = vld [vmem:[%s7 + $0xc] sm:$0xf]
      %v1137 = vld [vmem:[%s7 + $0x10] sm:$0xf]
      %v1138 = vld [vmem:[%s7 + $0x14] sm:$0xf]
      %v1139 = vld [vmem:[%s7 + $0x18] sm:$0x1]
      %v1140 = vld [vmem:[%s8] sm:$0xff]
      %v1141 = vld [vmem:[%s8 + $0x8] sm:$0xff]
      %v1142 = vld [vmem:[%s8 + $0x10] sm:$0xff]
      %v1143 = vld [vmem:[%s8 + $0x18] sm:$0xff]
      %v1144 = vld [vmem:[%s8 + $0x20] sm:$0xff]
      %v1145 = vld [vmem:[%s8 + $0x28] sm:$0xff]
      %v1146 = vld [vmem:[%s8 + $0x30] sm:$0x3]
      %1148 = vset.pattern.permute.xlu0 0
      %1149 = vperm.xlu0 %1148, %v1140
      %v1150 = vpop.permute.xlu0 %1149
      %1153 = vset.pattern.permute.xlu0 0
      %1154 = vperm.xlu0 %1153, %v1141
      %v1155 = vpop.permute.xlu0 %1154
      %1158 = vset.pattern.permute.xlu0 0
      %1159 = vperm.xlu0 %1158, %v1142
      %v1160 = vpop.permute.xlu0 %1159
      %1163 = vset.pattern.permute.xlu0 0
      %1164 = vperm.xlu0 %1163, %v1143
      %v1165 = vpop.permute.xlu0 %1164
      %1168 = vset.pattern.permute.xlu0 0
      %1169 = vperm.xlu0 %1168, %v1144
      %v1170 = vpop.permute.xlu0 %1169
      %1173 = vset.pattern.permute.xlu0 0
      %1174 = vperm.xlu0 %1173, %v1145
      %v1175 = vpop.permute.xlu0 %1174
      %1178 = vset.pattern.permute.xlu0 0
      %1179 = vperm.xlu0 %1178, %v1146
      %v1180 = vpop.permute.xlu0 %1179
      %v1189 = vunpack.c.l.b16 %v1133
      %v1190 = vunpack.c.l.b16 %v1134
      %v1191 = vunpack.c.l.b16 %v1135
      %v1192 = vunpack.c.l.b16 %v1136
      %v1193 = vunpack.c.l.b16 %v1137
      %v1194 = vunpack.c.l.b16 %v1138
      %v1195 = vunpack.c.l.b16 %v1139
      %v1196 = vpack.c.b16 %v1190, %v1189
      %v1197 = vpack.c.b16 %v1192, %v1191
      %v1198 = vpack.c.b16 %v1194, %v1193
      %v1199 = vpack.c.b16 %v1195, %v1195
      %v1201 = vsel %vm921, %v1196, 0
      %v1204 = vsel %vm921, %v1197, 0
      %v1207 = vsel %vm921, %v1198, 0
      %v1210 = vsel %vm921, %v1199, 0
      %v1213 = vsel %vm934, %v1129, 0
      %v1216 = vsel %vm934, %v1130, 0
      %v1219 = vsel %vm934, %v1131, 0
      %v1222 = vsel %vm934, %v1132, 0
      %1224 = vmatprep.subr.bf16.mxu0 %v1118
      %1225 = vmatpush1.bf16.msra.mxu0 %v1117
      %1226 = vmatprep.subr.bf16.mxu0 %v1122
      %1227 = vmatpush1.bf16.msra.mxu0 %v1121
      %1228 = vmatprep.subr.bf16.mxu0 %v1126
      %1229 = vmatpush1.bf16.msra.mxu0 %v1125
      %1230 = vmatprep.subr.bf16.mxu0 %v1216
      %1231 = vmatpush1.bf16.msra.mxu0 %v1213
      %1232 = vmatprep.subr.bf16.mxu0 0
      %1233 = vmatpush1.bf16.msra.mxu0 0
      %1234 = vmatprep.subr.bf16.mxu0 0
      %1235 = vmatpush1.bf16.msra.mxu0 0
      %1236 = vmatprep.subr.bf16.mxu0 0
      %1237 = vmatpush1.bf16.msra.mxu0 0
      %1238 = vmatprep.subr.bf16.mxu0 0
      %1239 = vmatpush1.bf16.msra.mxu0 0
      %1240 = vmatprep.subr.bf16.mxu0 0
      %1241 = vmatpush1.bf16.msra.mxu0 0
      %1242 = vmatprep.subr.bf16.mxu0 0
      %1243 = vmatpush1.bf16.msra.mxu0 0
      %1244 = vmatprep.subr.bf16.mxu0 0
      %1245 = vmatpush1.bf16.msra.mxu0 0
      %1246 = vmatprep.subr.bf16.mxu0 0
      %1247 = vmatpush1.bf16.msra.mxu0 0
      %1248 = vmatprep.subr.bf16.mxu0 0
      %1249 = vmatpush1.bf16.msra.mxu0 0
      %1250 = vmatprep.subr.bf16.mxu0 0
      %1251 = vmatpush1.bf16.msra.mxu0 0
      %1252 = vmatprep.subr.bf16.mxu0 0
      %1253 = vmatpush1.bf16.msra.mxu0 0
      %1254 = vmatprep.subr.bf16.mxu0 0
      %1255 = vmatpush1.bf16.msra.mxu0 0
      %1256 = vmatprep.mubr.bf16.mxu0 0
      %1257 = vmatmul.mubr.bf16.gmra.mrb[0].mxu0 %v1201
      %v1258 = vpop.f32.mrb[0].mxu0
      %v1259 = vadd.f32 %v1150, %v1258
      %v1260 = vpop.f32.mrb[0].mxu0
      %v1261 = vadd.f32 %v1150, %v1260
      %v1262 = vpop.f32.mrb[0].mxu0
      %v1263 = vadd.f32 %v1155, %v1262
      %v1264 = vpop.f32.mrb[0].mxu0
      %v1265 = vadd.f32 %v1155, %v1264
      %1266 = vmatprep.mubr.bf16.mxu0 0
      %1267 = vmatmul.mubr.bf16.gmra.mrb[0].mxu0 %v1204
      %v1268 = vpop.f32.mrb[0].mxu0
      %v1269 = vadd.f32 %v1160, %v1268
      %v1270 = vpop.f32.mrb[0].mxu0
      %v1271 = vadd.f32 %v1160, %v1270
      %v1272 = vpop.f32.mrb[0].mxu0
      %v1273 = vadd.f32 %v1165, %v1272
      %v1274 = vpop.f32.mrb[0].mxu0
      %v1275 = vadd.f32 %v1165, %v1274
      %1276 = vmatprep.mubr.bf16.mxu0 0
      %1277 = vmatmul.mubr.bf16.gmra.mrb[0].mxu0 %v1207
      %v1278 = vpop.f32.mrb[0].mxu0
      %v1279 = vadd.f32 %v1170, %v1278
      %v1280 = vpop.f32.mrb[0].mxu0
      %v1281 = vadd.f32 %v1170, %v1280
      %v1282 = vpop.f32.mrb[0].mxu0
      %v1283 = vadd.f32 %v1175, %v1282
      %v1284 = vpop.f32.mrb[0].mxu0
      %v1285 = vadd.f32 %v1175, %v1284
      %1286 = vmatprep.mubr.bf16.mxu0 0
      %1287 = vmatmul.mubr.bf16.gmra.mrb[0].mxu0 %v1210
      %v1288 = vpop.f32.mrb[0].mxu0
      %v1289 = vadd.f32 %v1180, %v1288
      %v1290 = vpop.f32.mrb[0].mxu0
      %v1291 = vadd.f32 %v1180, %v1290
      %v1292 = vpop.f32.mrb[0].mxu0
      %v1293 = vpop.f32.mrb[0].mxu0
      %1294 = vdwg.mxu0
      %1295 = vmatprep.subr.bf16.mxu0 %v1120
      %1296 = vmatpush1.bf16.msra.mxu0 %v1119
      %1297 = vmatprep.subr.bf16.mxu0 %v1124
      %1298 = vmatpush1.bf16.msra.mxu0 %v1123
      %1299 = vmatprep.subr.bf16.mxu0 %v1128
      %1300 = vmatpush1.bf16.msra.mxu0 %v1127
      %1301 = vmatprep.subr.bf16.mxu0 %v1222
      %1302 = vmatpush1.bf16.msra.mxu0 %v1219
      %1303 = vmatprep.subr.bf16.mxu0 0
      %1304 = vmatpush1.bf16.msra.mxu0 0
      %1305 = vmatprep.subr.bf16.mxu0 0
      %1306 = vmatpush1.bf16.msra.mxu0 0
      %1307 = vmatprep.subr.bf16.mxu0 0
      %1308 = vmatpush1.bf16.msra.mxu0 0
      %1309 = vmatprep.subr.bf16.mxu0 0
      %1310 = vmatpush1.bf16.msra.mxu0 0
      %1311 = vmatprep.subr.bf16.mxu0 0
      %1312 = vmatpush1.bf16.msra.mxu0 0
      %1313 = vmatprep.subr.bf16.mxu0 0
      %1314 = vmatpush1.bf16.msra.mxu0 0
      %1315 = vmatprep.subr.bf16.mxu0 0
      %1316 = vmatpush1.bf16.msra.mxu0 0
      %1317 = vmatprep.subr.bf16.mxu0 0
      %1318 = vmatpush1.bf16.msra.mxu0 0
      %1319 = vmatprep.subr.bf16.mxu0 0
      %1320 = vmatpush1.bf16.msra.mxu0 0
      %1321 = vmatprep.subr.bf16.mxu0 0
      %1322 = vmatpush1.bf16.msra.mxu0 0
      %1323 = vmatprep.subr.bf16.mxu0 0
      %1324 = vmatpush1.bf16.msra.mxu0 0
      %1325 = vmatprep.subr.bf16.mxu0 0
      %1326 = vmatpush1.bf16.msra.mxu0 0
      %1327 = vmatprep.mubr.bf16.mxu0 0
      %1328 = vmatmul.mubr.bf16.gmra.mrb[0].mxu0 %v1201
      %v1329 = vpop.f32.mrb[0].mxu0
      %v1330 = vadd.f32 %v1150, %v1329
      %v1331 = vpop.f32.mrb[0].mxu0
      %v1332 = vadd.f32 %v1150, %v1331
      %v1333 = vpop.f32.mrb[0].mxu0
      %v1334 = vadd.f32 %v1155, %v1333
      %v1335 = vpop.f32.mrb[0].mxu0
      %v1336 = vadd.f32 %v1155, %v1335
      %1337 = vmatprep.mubr.bf16.mxu0 0
      %1338 = vmatmul.mubr.bf16.gmra.mrb[0].mxu0 %v1204
      %v1339 = vpop.f32.mrb[0].mxu0
      %v1340 = vadd.f32 %v1160, %v1339
      %v1341 = vpop.f32.mrb[0].mxu0
      %v1342 = vadd.f32 %v1160, %v1341
      %v1343 = vpop.f32.mrb[0].mxu0
      %v1344 = vadd.f32 %v1165, %v1343
      %v1345 = vpop.f32.mrb[0].mxu0
      %v1346 = vadd.f32 %v1165, %v1345
      %1347 = vmatprep.mubr.bf16.mxu0 0
      %1348 = vmatmul.mubr.bf16.gmra.mrb[0].mxu0 %v1207
      %v1349 = vpop.f32.mrb[0].mxu0
      %v1350 = vadd.f32 %v1170, %v1349
      %v1351 = vpop.f32.mrb[0].mxu0
      %v1352 = vadd.f32 %v1170, %v1351
      %v1353 = vpop.f32.mrb[0].mxu0
      %v1354 = vadd.f32 %v1175, %v1353
      %v1355 = vpop.f32.mrb[0].mxu0
      %v1356 = vadd.f32 %v1175, %v1355
      %1357 = vmatprep.mubr.bf16.mxu0 0
      %1358 = vmatmul.mubr.bf16.gmra.mrb[0].mxu0 %v1210
      %v1359 = vpop.f32.mrb[0].mxu0
      %v1360 = vadd.f32 %v1180, %v1359
      %v1361 = vpop.f32.mrb[0].mxu0
      %v1362 = vadd.f32 %v1180, %v1361
      %v1363 = vpop.f32.mrb[0].mxu0
      %v1364 = vpop.f32.mrb[0].mxu0
      %1365 = vdwg.mxu0
      %v1366 = vmax.f32 %v1259, 0.0
      %v1367 = vmax.f32 %v1261, 0.0
      %v1368 = vmax.f32 %v1330, 0.0
      %v1369 = vmax.f32 %v1332, 0.0
      %v1370 = vmax.f32 %v1263, 0.0
      %v1371 = vmax.f32 %v1265, 0.0
      %v1372 = vmax.f32 %v1334, 0.0
      %v1373 = vmax.f32 %v1336, 0.0
      %v1374 = vmax.f32 %v1269, 0.0
      %v1375 = vmax.f32 %v1271, 0.0
      %v1376 = vmax.f32 %v1340, 0.0
      %v1377 = vmax.f32 %v1342, 0.0
      %v1378 = vmax.f32 %v1273, 0.0
      %v1379 = vmax.f32 %v1275, 0.0
      %v1380 = vmax.f32 %v1344, 0.0
      %v1381 = vmax.f32 %v1346, 0.0
      %v1382 = vmax.f32 %v1279, 0.0
      %v1383 = vmax.f32 %v1281, 0.0
      %v1384 = vmax.f32 %v1350, 0.0
      %v1385 = vmax.f32 %v1352, 0.0
      %v1386 = vmax.f32 %v1283, 0.0
      %v1387 = vmax.f32 %v1285, 0.0
      %v1388 = vmax.f32 %v1354, 0.0
      %v1389 = vmax.f32 %v1356, 0.0
      %v1390 = vmax.f32 %v1289, 0.0
      %v1391 = vmax.f32 %v1291, 0.0
      %v1392 = vmax.f32 %v1360, 0.0
      %v1393 = vmax.f32 %v1362, 0.0
      %v1394 = vpack.c.bf16 %v1370, %v1366
      %v1395 = vpack.c.bf16 %v1371, %v1367
      %v1396 = vpack.c.bf16 %v1372, %v1368
      %v1397 = vpack.c.bf16 %v1373, %v1369
      %v1398 = vpack.c.bf16 %v1378, %v1374
      %v1399 = vpack.c.bf16 %v1379, %v1375
      %v1400 = vpack.c.bf16 %v1380, %v1376
      %v1401 = vpack.c.bf16 %v1381, %v1377
      %v1402 = vpack.c.bf16 %v1386, %v1382
      %v1403 = vpack.c.bf16 %v1387, %v1383
      %v1404 = vpack.c.bf16 %v1388, %v1384
      %v1405 = vpack.c.bf16 %v1389, %v1385
      %v1406 = vpack.c.bf16 %v1390, %v1390
      %v1407 = vpack.c.bf16 %v1391, %v1391
      %v1408 = vpack.c.bf16 %v1392, %v1392
      %v1409 = vpack.c.bf16 %v1393, %v1393
      %v1410 = vld [vmem:[%s9] sm:$0x3]
      %v1411 = vld [vmem:[%s10] sm:$0x7]
      %1413 = vset.pattern.permute.xlu0 0
      %1414 = vperm.xlu0 %1413, %v1411
      %v1415 = vpop.permute.xlu0 %1414
      %v1418 = vsel %vm921, %v1410, 0
      %v1421 = vsel %vm934, %v1406, 0
      %v1424 = vsel %vm934, %v1407, 0
      %v1427 = vsel %vm934, %v1408, 0
      %v1430 = vsel %vm934, %v1409, 0
      %1432 = vmatprep.subr.bf16.mxu0 %v1395
      %1433 = vmatpush1.bf16.msra.mxu0 %v1394
      %1434 = vmatprep.subr.bf16.mxu0 %v1399
      %1435 = vmatpush1.bf16.msra.mxu0 %v1398
      %1436 = vmatprep.subr.bf16.mxu0 %v1403
      %1437 = vmatpush1.bf16.msra.mxu0 %v1402
      %1438 = vmatprep.subr.bf16.mxu0 %v1424
      %1439 = vmatpush1.bf16.msra.mxu0 %v1421
      %1440 = vmatprep.subr.bf16.mxu0 0
      %1441 = vmatpush1.bf16.msra.mxu0 0
      %1442 = vmatprep.subr.bf16.mxu0 0
      %1443 = vmatpush1.bf16.msra.mxu0 0
      %1444 = vmatprep.subr.bf16.mxu0 0
      %1445 = vmatpush1.bf16.msra.mxu0 0
      %1446 = vmatprep.subr.bf16.mxu0 0
      %1447 = vmatpush1.bf16.msra.mxu0 0
      %1448 = vmatprep.subr.bf16.mxu0 0
      %1449 = vmatpush1.bf16.msra.mxu0 0
      %1450 = vmatprep.subr.bf16.mxu0 0
      %1451 = vmatpush1.bf16.msra.mxu0 0
      %1452 = vmatprep.subr.bf16.mxu0 0
      %1453 = vmatpush1.bf16.msra.mxu0 0
      %1454 = vmatprep.subr.bf16.mxu0 0
      %1455 = vmatpush1.bf16.msra.mxu0 0
      %1456 = vmatprep.subr.bf16.mxu0 0
      %1457 = vmatpush1.bf16.msra.mxu0 0
      %1458 = vmatprep.subr.bf16.mxu0 0
      %1459 = vmatpush1.bf16.msra.mxu0 0
      %1460 = vmatprep.subr.bf16.mxu0 0
      %1461 = vmatpush1.bf16.msra.mxu0 0
      %1462 = vmatprep.subr.bf16.mxu0 0
      %1463 = vmatpush1.bf16.msra.mxu0 0
      %1464 = vmatprep.mubr.bf16.mxu0 0
      %1465 = vmatmul.mubr.bf16.gmra.mrb[0].mxu0 %v1418
      %v1466 = vpop.f32.mrb[0].mxu0
      %v1467 = vadd.f32 %v1415, %v1466
      %v1468 = vpop.f32.mrb[0].mxu0
      %v1469 = vadd.f32 %v1415, %v1468
      %v1470 = vpop.f32.mrb[0].mxu0
      %v1471 = vpop.f32.mrb[0].mxu0
      %1472 = vdwg.mxu0
      %1473 = vmatprep.subr.bf16.mxu0 %v1397
      %1474 = vmatpush1.bf16.msra.mxu0 %v1396
      %1475 = vmatprep.subr.bf16.mxu0 %v1401
      %1476 = vmatpush1.bf16.msra.mxu0 %v1400
      %1477 = vmatprep.subr.bf16.mxu0 %v1405
      %1478 = vmatpush1.bf16.msra.mxu0 %v1404
      %1479 = vmatprep.subr.bf16.mxu0 %v1430
      %1480 = vmatpush1.bf16.msra.mxu0 %v1427
      %1481 = vmatprep.subr.bf16.mxu0 0
      %1482 = vmatpush1.bf16.msra.mxu0 0
      %1483 = vmatprep.subr.bf16.mxu0 0
      %1484 = vmatpush1.bf16.msra.mxu0 0
      %1485 = vmatprep.subr.bf16.mxu0 0
      %1486 = vmatpush1.bf16.msra.mxu0 0
      %1487 = vmatprep.subr.bf16.mxu0 0
      %1488 = vmatpush1.bf16.msra.mxu0 0
      %1489 = vmatprep.subr.bf16.mxu0 0
      %1490 = vmatpush1.bf16.msra.mxu0 0
      %1491 = vmatprep.subr.bf16.mxu0 0
      %1492 = vmatpush1.bf16.msra.mxu0 0
      %1493 = vmatprep.subr.bf16.mxu0 0
      %1494 = vmatpush1.bf16.msra.mxu0 0
      %1495 = vmatprep.subr.bf16.mxu0 0
      %1496 = vmatpush1.bf16.msra.mxu0 0
      %1497 = vmatprep.subr.bf16.mxu0 0
      %1498 = vmatpush1.bf16.msra.mxu0 0
      %1499 = vmatprep.subr.bf16.mxu0 0
      %1500 = vmatpush1.bf16.msra.mxu0 0
      %1501 = vmatprep.subr.bf16.mxu0 0
      %1502 = vmatpush1.bf16.msra.mxu0 0
      %1503 = vmatprep.subr.bf16.mxu0 0
      %1504 = vmatpush1.bf16.msra.mxu0 0
      %1505 = vmatprep.mubr.bf16.mxu0 0
      %1506 = vmatmul.mubr.bf16.gmra.mrb[0].mxu0 %v1418
      %v1507 = vpop.f32.mrb[0].mxu0
      %v1508 = vadd.f32 %v1415, %v1507
      %v1509 = vpop.f32.mrb[0].mxu0
      %v1510 = vadd.f32 %v1415, %v1509
      %v1511 = vpop.f32.mrb[0].mxu0
      %v1512 = vpop.f32.mrb[0].mxu0
      %1513 = vdwg.mxu0
      %v1518 = vcombine.low %v1467, %v1469
      %v1519 = vcombine.low %v1508, %v1510
      %1522 = vst [vmem:[%s363] sm:$0x77] %v1518
      %1523 = vst [vmem:[%s363 + $0x8] sm:$0x77] %v1519
      %s1524 = smul.u32 4, %s23
      %p1525 = scmp.lt.s32.totalorder %s1524, 7
      %s1526 = scalar_select %p1525, %s1524, 7
      %s1527 = smul.addr %s1526, 4
      %s1528 = scalar_lea.vmem %s11, %s1527
      // Predicated region
      $region61: #{odefunc_forward.1} parent=59 // pred_check
        %p1529 = pneg %p256
      $region62: #{odefunc_forward.1} parent=59 // pred_check_branch
        %1531 = sbr.rel (%p1529) target = $region64
      $region63: #{odefunc_forward.1} parent=59 // pred_region
        %s1532 = smul.u32 4, %s23
      $region64: #{odefunc_forward.1} parent=59 // pred_fallthru
        _
    $region60: #{odefunc_forward.1} parent=5 // pred_fallthru
      _
    %p1533 = scmp.le.s32.totalorder 2, %s18
    // Predicated region
    $region65: #{odefunc_forward.1} parent=5 // pred_check
      %p1534 = pneg %p1533
    $region66: #{odefunc_forward.1} parent=5 // pred_check_branch
      %1536 = sbr.rel (%p1534) target = $region68
    $region67: #{odefunc_forward.1} parent=5 // pred_region
      %s1537 = ssub.s32 %s18, 2
      // Predicated region
      $region69: #{odefunc_forward.1} parent=67 // pred_check
        %p1538 = pneg %p262
      $region70: #{odefunc_forward.1} parent=67 // pred_check_branch
        %1540 = sbr.rel (%p1538) target = $region72
      $region71: #{odefunc_forward.1} parent=67 // pred_region
        %s1541 = smul.u32 4, %s24
        %p1542 = scmp.lt.s32.totalorder %s1541, 7
        %s1543 = scalar_select %p1542, %s1541, 7
        %s1544 = smul.addr %s1543, 4
        %s1545 = scalar_lea.vmem %s11, %s1544
      $region72: #{odefunc_forward.1} parent=67 // pred_fallthru
        _
    $region68: #{odefunc_forward.1} parent=5 // pred_fallthru
      _
  $region6: #{odefunc_forward.1} parent=0 // loop_footer
    %s22 = sadd.s32 1, %s18
  $region7: #{odefunc_forward.1} parent=0 // loop_footer_branch
    %17 = sbr.rel target = $region3
  $region8: #{odefunc_forward.1} parent=0 // loop_exit
    _

</llo_original>
